<compile_context>
chip_gen: v7x
topology: tpu7x:2x2x1
jax: 0.10.0
libtpu: 0.0.40
codegen_flags: <defaults>
</compile_context>

<pallas_src>
import jax
import jax.numpy as jnp
from jax.experimental import pallas as pl
from jax.experimental.pallas import tpu as pltpu

LANE = 128  # every feature dim is padded to one full lane width


# -----------------------------------------------------------------------------
# Fused kernel: grid = (gin_layer, node_row_block, node_col_block)
# -----------------------------------------------------------------------------
def make_fused_kernel(tm, tk):
    def kernel(x_ref, pool_ref, adj_ref,
               w1_ref, b1_ref, w2_ref, b2_ref, eps_ref,
               predw_ref, predb_ref,
               out_ref,
               h_scr, pacc, gacc):
        l = pl.program_id(0)           # GIN layer (outermost, sequential dependency)
        i = pl.program_id(1)           # node-row block
        k = pl.program_id(2)           # node-col block (adjacency reduction, innermost)
        nl = pl.num_programs(0)
        ni = pl.num_programs(1)
        nk = pl.num_programs(2)

        cur = l % 2                    # h double buffer: read layer l from slot `cur`,
        nxt = (l + 1) % 2              # write layer l+1 rows into slot `nxt`

        row0 = pl.multiple_of(i * tm, tm)
        col0 = pl.multiple_of(k * tk, tk)

        # ---- very first grid step: stage x into h slot 0, zero the pooled-h buffer ----
        @pl.when((l == 0) & (i == 0) & (k == 0))
        def _():
            h_scr[0] = x_ref[...]
            gacc[...] = jnp.zeros_like(gacc)

        # ---- prediction-layer-0 term (pool @ x), accumulated per node-row block ----
        @pl.when((l == 0) & (k == 0))
        def _():
            x_rows = x_ref[pl.ds(row0, tm), :]
            gacc[0] = gacc[0] + jnp.dot(pool_ref[...], x_rows,
                                        preferred_element_type=jnp.float32)

        # ---- neighbor sum-pool: init with (1 + eps_l) * h (learn_eps=True), then
        #      accumulate adjacency (row, col) tiles over the col reduction ----
        @pl.when(k == 0)
        def _():
            h_rows = h_scr[cur, pl.ds(row0, tm), :].astype(jnp.float32)
            pacc[...] = eps_ref[0] * h_rows

        h_cols = h_scr[cur, pl.ds(col0, tk), :]
        pacc[...] += jnp.dot(adj_ref[...], h_cols, preferred_element_type=jnp.float32)

        # ---- end of the col reduction for this row block: 2-layer MLP (BN folded),
        #      write h_{l+1} rows, stage this layer's graph-pooled representation ----
        @pl.when(k == nk - 1)
        def _():
            z = jnp.dot(pacc[...].astype(jnp.bfloat16), w1_ref[0],
                        preferred_element_type=jnp.float32) + b1_ref[0]
            z = jnp.maximum(z, 0.0)
            hn = jnp.dot(z.astype(jnp.bfloat16), w2_ref[0],
                         preferred_element_type=jnp.float32) + b2_ref[0]
            hn = jnp.maximum(hn, 0.0).astype(jnp.bfloat16)
            h_scr[nxt, pl.ds(row0, tm), :] = hn
            # prediction layer (l+1) graph pooling for this row block (dropout = identity)
            gacc[l + 1] = gacc[l + 1] + jnp.dot(pool_ref[...], hn,
                                                preferred_element_type=jnp.float32)

        # ---- final grid step: single merged prediction GEMM over all L+1 layers ----
        @pl.when((l == nl - 1) & (i == ni - 1) & (k == nk - 1))
        def _():
            n_pred = gacc.shape[0]
            pooled_cat = jnp.concatenate([gacc[j] for j in range(n_pred)],
                                         axis=-1).astype(jnp.bfloat16)
            out_ref[...] = (jnp.dot(pooled_cat, predw_ref[...],
                                    preferred_element_type=jnp.float32)
                            + predb_ref[...])

    return kernel


# -----------------------------------------------------------------------------
# Wrapper: fold BN + pad/stack/bf16-cast the weights ONCE, return a jitted forward
# -----------------------------------------------------------------------------
def _round_up(v, m):
    return ((v + m - 1) // m) * m


def _pick_tile(n_pad, target):
    t = min(target, n_pad)
    while n_pad % t:
        t -= LANE
    return t


def _pad2(a, rows, cols, dtype):
    a = jnp.asarray(a, jnp.float32)
    out = jnp.zeros((rows, cols), jnp.float32)
    out = out.at[: a.shape[0], : a.shape[1]].set(a)
    return out.astype(dtype)


def make_graphnn_forward(params, output_dim):
    """Pre-fold eval-mode BN into the linears, pad / stack / cast the weights once,
    and return a jitted forward(x, adj, graph_pool) -> (num_graphs, output_dim)."""
    num_gin = len(params["gin"])
    num_pred = len(params["pred"])
    assert num_gin >= 1 and num_pred == num_gin + 1

    # ---- eval-mode BN folded into the linears (in f32), then padded + bf16-cast ----
    w1s, b1s, w2s, b2s = [], [], [], []
    for p in params["gin"]:
        w1s.append(_pad2(p["w1"] * p["s1"], LANE, LANE, jnp.bfloat16))
        b1s.append(_pad2(p["b1"] * p["s1"] + p["t1"], 1, LANE, jnp.float32))
        w2s.append(_pad2(p["w2"] * p["s2"], LANE, LANE, jnp.bfloat16))
        b2s.append(_pad2(p["b2"] * p["s2"] + p["t2"], 1, LANE, jnp.float32))
    w1s = jnp.stack(w1s)          # (L, 128, 128) bf16
    b1s = jnp.stack(b1s)          # (L, 1, 128)   f32
    w2s = jnp.stack(w2s)
    b2s = jnp.stack(b2s)

    epsb = (1.0 + jnp.asarray(params["eps"], jnp.float32)).reshape(num_gin, 1, 1)
    epsb = epsb * jnp.ones((num_gin, 1, LANE), jnp.float32)        # (L, 1, 128) f32

    # row-concatenated prediction weights and pre-summed biases (merged pred GEMM)
    predw = jnp.concatenate([_pad2(p["w"], LANE, LANE, jnp.bfloat16)
                             for p in params["pred"]], axis=0)     # ((L+1)*128, 128)
    predb = sum(_pad2(p["b"], 1, LANE, jnp.float32) for p in params["pred"])  # (1, 128)

    try:
        vmem_cap = int(pltpu.get_tpu_info().vmem_capacity_bytes)
    except Exception:  # pragma: no cover - conservative fallback
        vmem_cap = 128 << 20
    # Leave headroom for double-buffered DMAs and internal scratch: never request the
    # entire physical VMEM (v7x has only 64 MiB per TensorCore).
    vmem_limit = min(vmem_cap * 3 // 4, 100 << 20)
    big_vmem = vmem_cap >= (100 << 20)        # v5e / v6e (128 MiB) vs. v7x (64 MiB)

    @jax.jit
    def forward(x, adj, graph_pool):
        n = x.shape[0]
        g = graph_pool.shape[0]
        n_pad = _round_up(n, LANE)            # lane-dense node (K) dimension
        g_pad = _round_up(g, 16)              # bf16 sublane packing for the pool matrix

        # >=256 node rows per MXU pass (v6e/v7x 256-wide MXUs); bigger adjacency col
        # tiles where VMEM allows.
        tm = _pick_tile(n_pad, 256)
        tk = _pick_tile(n_pad, 1024 if big_vmem else 512)

        x_p = _pad2(x, n_pad, LANE, jnp.bfloat16)
        adj_p = _pad2(adj, n_pad, n_pad, jnp.bfloat16)         # 0/1 entries exact in bf16
        pool_p = _pad2(graph_pool, g_pad, n_pad, jnp.bfloat16)

        grid = (num_gin, n_pad // tm, n_pad // tk)

        # advisory cost estimate
        flops = num_gin * (2 * n_pad * n_pad * LANE            # adj @ h
                           + 2 * 2 * n_pad * LANE * LANE       # 2-layer MLP
                           + 2 * g_pad * n_pad * LANE)         # pool @ h
        flops += 2 * g_pad * n_pad * LANE                      # pool @ x
        flops += 2 * g_pad * num_pred * LANE * LANE            # merged prediction GEMM
        bytes_accessed = (num_gin * n_pad * n_pad * 2          # adj re-streamed per layer
                          + n_pad * LANE * 2 + g_pad * n_pad * 2
                          + num_gin * (2 * LANE * LANE * 2 + 3 * LANE * 4)
                          + num_pred * LANE * LANE * 2 + LANE * 4
                          + g_pad * LANE * 4)
        cost = pl.CostEstimate(flops=flops, transcendentals=0,
                               bytes_accessed=bytes_accessed)

        score = pl.pallas_call(
            make_fused_kernel(tm, tk),
            out_shape=jax.ShapeDtypeStruct((g_pad, LANE), jnp.float32),
            grid_spec=pltpu.PrefetchScalarGridSpec(
                num_scalar_prefetch=0,
                grid=grid,
                in_specs=[
                    pl.BlockSpec((n_pad, LANE), lambda l, i, k: (0, 0)),       # x (resident)
                    pl.BlockSpec((g_pad, tm), lambda l, i, k: (0, i)),         # graph-pool col slab
                    pl.BlockSpec((tm, tk), lambda l, i, k: (i, k)),            # adjacency tile (pipelined)
                    pl.BlockSpec((1, LANE, LANE), lambda l, i, k: (l, 0, 0)),  # w1 (BN folded)
                    pl.BlockSpec((1, 1, LANE), lambda l, i, k: (l, 0, 0)),     # b1
                    pl.BlockSpec((1, LANE, LANE), lambda l, i, k: (l, 0, 0)),  # w2 (BN folded)
                    pl.BlockSpec((1, 1, LANE), lambda l, i, k: (l, 0, 0)),     # b2
                    pl.BlockSpec((1, 1, LANE), lambda l, i, k: (l, 0, 0)),     # (1 + eps_l)
                    pl.BlockSpec((num_pred * LANE, LANE), lambda l, i, k: (0, 0)),  # pred W (row-concat)
                    pl.BlockSpec((1, LANE), lambda l, i, k: (0, 0)),           # pred bias (pre-summed)
                ],
                out_specs=pl.BlockSpec((g_pad, LANE), lambda l, i, k: (0, 0)),
                scratch_shapes=[
                    pltpu.VMEM((2, n_pad, LANE), jnp.bfloat16),                # h double buffer
                    pltpu.VMEM((tm, LANE), jnp.float32),                       # adj@h row accumulator
                    pltpu.VMEM((num_pred, g_pad, LANE), jnp.float32),          # pooled_h per layer
                ]),
            compiler_params=pltpu.CompilerParams(
                dimension_semantics=("arbitrary", "arbitrary", "arbitrary"),
                vmem_limit_bytes=vmem_limit),
            cost_estimate=cost,
        )(x_p, pool_p, adj_p, w1s, b1s, w2s, b2s, epsb, predw, predb)

        return score[:g, :output_dim]

    return forward


# -----------------------------------------------------------------------------
# Pure-JAX f32 reference (unfolded BN, unpadded) for correctness checking
# -----------------------------------------------------------------------------
def reference_forward(x, adj, graph_pool, params):
    hidden_rep = [x]
    h = x
    for layer, p in enumerate(params["gin"]):
        pooled = adj @ h + (1.0 + params["eps"][layer]) * h
        z = jnp.maximum((pooled @ p["w1"] + p["b1"]) * p["s1"] + p["t1"], 0.0)
        z = z @ p["w2"] + p["b2"]
        h = jnp.maximum(z * p["s2"] + p["t2"], 0.0)
        hidden_rep.append(h)
    score = 0.0
    for layer, h in enumerate(hidden_rep):
        pp = params["pred"][layer]
        score = score + (graph_pool @ h) @ pp["w"] + pp["b"]
    return score


# -----------------------------------------------------------------------------
# Deterministic parameter / input construction
# -----------------------------------------------------------------------------
def build_params(key, num_layers, input_dim, hidden_dim, output_dim):
    bn_eps = 1e-5
    params = {"eps": jnp.zeros((num_layers - 1,), jnp.float32),  # nn.Parameter(torch.zeros(...))
              "gin": [], "pred": []}

    def dense(k, din, dout):
        return jax.random.normal(k, (din, dout), jnp.float32) * 0.1

    for layer in range(num_layers - 1):
        din = input_dim if layer == 0 else hidden_dim
        key, k1, k2, k3, k4, k5, k6, k7, k8 = jax.random.split(key, 9)
        gamma1 = 1.0 + 0.1 * jax.random.normal(k3, (hidden_dim,), jnp.float32)
        beta1 = 0.1 * jax.random.normal(k4, (hidden_dim,), jnp.float32)
        gamma2 = 1.0 + 0.1 * jax.random.normal(k7, (hidden_dim,), jnp.float32)
        beta2 = 0.1 * jax.random.normal(k8, (hidden_dim,), jnp.float32)
        # eval-mode BN (running_mean=0, running_var=1) as per-feature scale/shift
        scale1 = (gamma1 / jnp.sqrt(1.0 + bn_eps)).reshape(1, hidden_dim)
        shift1 = beta1.reshape(1, hidden_dim)
        scale2 = (gamma2 / jnp.sqrt(1.0 + bn_eps)).reshape(1, hidden_dim)
        shift2 = beta2.reshape(1, hidden_dim)
        params["gin"].append({
            "w1": dense(k1, din, hidden_dim),
            "b1": (0.1 * jax.random.normal(k2, (hidden_dim,), jnp.float32)).reshape(1, hidden_dim),
            "s1": scale1, "t1": shift1,
            "w2": dense(k5, hidden_dim, hidden_dim),
            "b2": (0.1 * jax.random.normal(k6, (hidden_dim,), jnp.float32)).reshape(1, hidden_dim),
            "s2": scale2, "t2": shift2,
        })

    for layer in range(num_layers):
        din = input_dim if layer == 0 else hidden_dim
        key, k1, k2 = jax.random.split(key, 3)
        params["pred"].append({
            "w": dense(k1, din, output_dim),
            "b": (0.1 * jax.random.normal(k2, (output_dim,), jnp.float32)).reshape(1, output_dim),
        })
    return params


def build_graph_batch(key, n_graphs, nodes_per_graph, input_dim):
    """Dense block-diagonal adjacency (no self loops; learn_eps=True path) and sum graph-pool."""
    n_total = n_graphs * nodes_per_graph
    key, kx, ka = jax.random.split(key, 3)
    x = jax.random.normal(kx, (n_total, input_dim), jnp.float32)

    adj = jnp.zeros((n_total, n_total), jnp.float32)
    upper = jax.random.bernoulli(ka, 0.4, (n_graphs, nodes_per_graph, nodes_per_graph))
    for g in range(n_graphs):
        blk = jnp.triu(upper[g].astype(jnp.float32), k=1)
        blk = blk + blk.T  # symmetric, zero diagonal
        s = g * nodes_per_graph
        adj = adj.at[s:s + nodes_per_graph, s:s + nodes_per_graph].set(blk)

    graph_pool = jnp.zeros((n_graphs, n_total), jnp.float32)
    for g in range(n_graphs):
        s = g * nodes_per_graph
        graph_pool = graph_pool.at[g, s:s + nodes_per_graph].set(1.0)  # 'sum' pooling
    return x, adj, graph_pool


if __name__ == "__main__":
    # Module hyper-parameters (small, consistent with the forward pass).
    num_layers = 3        # GraphNN layers (incl. input layer) -> 2 GIN layers
    num_mlp_layers = 2    # each MLP: Linear -> BN -> ReLU -> Linear (folded into the kernel)
    input_dim = 8
    hidden_dim = 32
    output_dim = 4
    n_graphs = 2
    nodes_per_graph = 8   # 16 nodes total

    key = jax.random.PRNGKey(0)
    key, kp, kg = jax.random.split(key, 3)
    params = build_params(kp, num_layers, input_dim, hidden_dim, output_dim)
    x, adj, graph_pool = build_graph_batch(kg, n_graphs, nodes_per_graph, input_dim)

    forward = make_graphnn_forward(params, output_dim)
    out = jax.block_until_ready(forward(x, adj, graph_pool))

    ref = reference_forward(x, adj, graph_pool, params)
    assert out.shape == (n_graphs, output_dim)
    # bf16 MXU operands with f32 accumulation: expect ~1e-2-level absolute deviation vs.
    # the pure-f32 reference; tolerance set accordingly.
    assert jnp.allclose(out, ref, atol=0.12, rtol=0.05), (
        f"Pallas output mismatch vs reference:\n{out}\nvs\n{ref}")

    print("KERNEL_OK")
</pallas_src>

<mosaic_0001>
module attributes {stable_mosaic.version = 11 : i64} {
  func.func @kernel(%arg0: i32, %arg1: i32, %arg2: i32, %arg3: memref<128x128xbf16, #tpu.memory_space<vmem>>, %arg4: memref<16x128xbf16, #tpu.memory_space<vmem>>, %arg5: memref<128x128xbf16, #tpu.memory_space<vmem>>, %arg6: memref<1x128x128xbf16, #tpu.memory_space<vmem>>, %arg7: memref<1x1x128xf32, #tpu.memory_space<vmem>>, %arg8: memref<1x128x128xbf16, #tpu.memory_space<vmem>>, %arg9: memref<1x1x128xf32, #tpu.memory_space<vmem>>, %arg10: memref<1x1x128xf32, #tpu.memory_space<vmem>>, %arg11: memref<384x128xbf16, #tpu.memory_space<vmem>>, %arg12: memref<1x128xf32, #tpu.memory_space<vmem>>, %arg13: memref<16x128xf32, #tpu.memory_space<vmem>>, %arg14: memref<2x128x128xbf16, #tpu.memory_space<vmem>>, %arg15: memref<128x128xf32, #tpu.memory_space<vmem>>, %arg16: memref<3x16x128xf32, #tpu.memory_space<vmem>>) attributes {dimension_semantics = [#tpu.dimension_semantics<arbitrary>, #tpu.dimension_semantics<arbitrary>, #tpu.dimension_semantics<arbitrary>], iteration_bounds = array<i64: 2, 1, 1>, scalar_prefetch = 0 : i64, scratch_operands = 3 : i64, tpu.core_type = #tpu.core_type<tc>, window_params = [{pipeline_mode = #tpu.pipeline_mode<synchronous>, transform_indices = @transform_0, window_bounds = array<i64: 128, 128>}, {transform_indices = @transform_1, window_bounds = array<i64: 16, 128>}, {transform_indices = @transform_2, window_bounds = array<i64: 128, 128>}, {transform_indices = @transform_3, window_bounds = array<i64: 1, 128, 128>}, {transform_indices = @transform_4, window_bounds = array<i64: 1, 1, 128>}, {transform_indices = @transform_5, window_bounds = array<i64: 1, 128, 128>}, {transform_indices = @transform_6, window_bounds = array<i64: 1, 1, 128>}, {transform_indices = @transform_7, window_bounds = array<i64: 1, 1, 128>}, {pipeline_mode = #tpu.pipeline_mode<synchronous>, transform_indices = @transform_8, window_bounds = array<i64: 384, 128>}, {pipeline_mode = #tpu.pipeline_mode<synchronous>, transform_indices = @transform_9, window_bounds = array<i64: 1, 128>}, {pipeline_mode = #tpu.pipeline_mode<synchronous>, transform_indices = @transform_10, window_bounds = array<i64: 16, 128>}]} {
    %c2_i32 = arith.constant 2 : i32
    %c0_i32 = arith.constant 0 : i32
    %0 = arith.cmpi eq, %c2_i32, %c0_i32 : i32
    %c1_i32 = arith.constant 1 : i32
    %1 = arith.select %0, %c1_i32, %c2_i32 : i32
    %2 = arith.remsi %arg0, %1 : i32
    %c0_i32_0 = arith.constant 0 : i32
    %3 = arith.cmpi ne, %2, %c0_i32_0 : i32
    %c0_i32_1 = arith.constant 0 : i32
    %4 = arith.cmpi slt, %2, %c0_i32_1 : i32
    %c0_i32_2 = arith.constant 0 : i32
    %5 = arith.cmpi slt, %1, %c0_i32_2 : i32
    %6 = arith.xori %4, %5 : i1
    %7 = arith.andi %6, %3 : i1
    %8 = arith.addi %2, %1 : i32
    %9 = arith.select %7, %8, %2 : i32
    %c1_i32_3 = arith.constant 1 : i32
    %10 = arith.addi %arg0, %c1_i32_3 : i32
    %c2_i32_4 = arith.constant 2 : i32
    %c0_i32_5 = arith.constant 0 : i32
    %11 = arith.cmpi eq, %c2_i32_4, %c0_i32_5 : i32
    %c1_i32_6 = arith.constant 1 : i32
    %12 = arith.select %11, %c1_i32_6, %c2_i32_4 : i32
    %13 = arith.remsi %10, %12 : i32
    %c0_i32_7 = arith.constant 0 : i32
    %14 = arith.cmpi ne, %13, %c0_i32_7 : i32
    %c0_i32_8 = arith.constant 0 : i32
    %15 = arith.cmpi slt, %13, %c0_i32_8 : i32
    %c0_i32_9 = arith.constant 0 : i32
    %16 = arith.cmpi slt, %12, %c0_i32_9 : i32
    %17 = arith.xori %15, %16 : i1
    %18 = arith.andi %17, %14 : i1
    %19 = arith.addi %13, %12 : i32
    %20 = arith.select %18, %19, %13 : i32
    %c128_i32 = arith.constant 128 : i32
    %21 = arith.muli %arg1, %c128_i32 : i32
    %22 = tpu.assume_multiple %21, 128 : i32
    %c128_i32_10 = arith.constant 128 : i32
    %23 = arith.muli %arg2, %c128_i32_10 : i32
    %24 = tpu.assume_multiple %23, 128 : i32
    %c0_i32_11 = arith.constant 0 : i32
    %25 = arith.cmpi eq, %arg0, %c0_i32_11 : i32
    %c0_i32_12 = arith.constant 0 : i32
    %26 = arith.cmpi eq, %arg1, %c0_i32_12 : i32
    %27 = arith.andi %25, %26 : i1
    %c0_i32_13 = arith.constant 0 : i32
    %28 = arith.cmpi eq, %arg2, %c0_i32_13 : i32
    %29 = arith.andi %27, %28 : i1
    %30 = arith.extui %29 : i1 to i32
    %c0_i32_14 = arith.constant 0 : i32
    %31 = arith.cmpi ne, %30, %c0_i32_14 : i32
    scf.if %31 {
      %c0_32 = arith.constant 0 : index
      %c0_33 = arith.constant 0 : index
      %59 = vector.load %arg3[%c0_32, %c0_33] : memref<128x128xbf16, #tpu.memory_space<vmem>>, vector<128x128xbf16>
      %c0_34 = arith.constant 0 : index
      %c0_35 = arith.constant 0 : index
      %c0_36 = arith.constant 0 : index
      %60 = vector.load %arg14[%c0_34, %c0_35, %c0_36] : memref<2x128x128xbf16, #tpu.memory_space<vmem>>, vector<1x128x128xbf16>
      %61 = vector.shape_cast %60 : vector<1x128x128xbf16> to vector<128x128xbf16>
      %62 = vector.shape_cast %59 : vector<128x128xbf16> to vector<1x128x128xbf16>
      tpu.vector_store %arg14[%c0_34, %c0_35, %c0_36], %62 {strides = array<i32>} : memref<2x128x128xbf16, #tpu.memory_space<vmem>>, vector<1x128x128xbf16>,
      %cst_37 = arith.constant 0.000000e+00 : f32
      %63 = vector.broadcast %cst_37 : f32 to vector<3x16x128xf32>
      %c0_38 = arith.constant 0 : index
      %c0_39 = arith.constant 0 : index
      %c0_40 = arith.constant 0 : index
      %64 = vector.load %arg16[%c0_38, %c0_39, %c0_40] : memref<3x16x128xf32, #tpu.memory_space<vmem>>, vector<3x16x128xf32>
      tpu.vector_store %arg16[%c0_38, %c0_39, %c0_40], %63 {strides = array<i32>} : memref<3x16x128xf32, #tpu.memory_space<vmem>>, vector<3x16x128xf32>,
    } else {
    }
    %c0_i32_15 = arith.constant 0 : i32
    %32 = arith.cmpi eq, %arg0, %c0_i32_15 : i32
    %c0_i32_16 = arith.constant 0 : i32
    %33 = arith.cmpi eq, %arg2, %c0_i32_16 : i32
    %34 = arith.andi %32, %33 : i1
    %35 = arith.extui %34 : i1 to i32
    %c0_i32_17 = arith.constant 0 : i32
    %36 = arith.cmpi ne, %35, %c0_i32_17 : i32
    scf.if %36 {
      %59 = arith.index_cast %22 : i32 to index
      %c0_32 = arith.constant 0 : index
      %60 = vector.load %arg3[%59, %c0_32] : memref<128x128xbf16, #tpu.memory_space<vmem>>, vector<128x128xbf16>
      %c0_33 = arith.constant 0 : index
      %c0_34 = arith.constant 0 : index
      %c0_35 = arith.constant 0 : index
      %61 = vector.load %arg16[%c0_33, %c0_34, %c0_35] : memref<3x16x128xf32, #tpu.memory_space<vmem>>, vector<1x16x128xf32>
      %62 = vector.shape_cast %61 : vector<1x16x128xf32> to vector<16x128xf32>
      %c0_36 = arith.constant 0 : index
      %c0_37 = arith.constant 0 : index
      %63 = vector.load %arg4[%c0_36, %c0_37] : memref<16x128xbf16, #tpu.memory_space<vmem>>, vector<16x128xbf16>
      %cst_38 = arith.constant dense<0.000000e+00> : vector<16x128xf32>
      %64 = tpu.matmul %63, %60, %cst_38 {dimension_numbers = #tpu.dot_dimension_numbers<[1], [0], [0], [1], [0, 0, 1, 1], [], []>} : vector<16x128xbf16>, vector<128x128xbf16>, vector<16x128xf32> -> vector<16x128xf32>
      %65 = arith.addf %62, %64 : vector<16x128xf32>
      %c0_39 = arith.constant 0 : index
      %c0_40 = arith.constant 0 : index
      %c0_41 = arith.constant 0 : index
      %66 = vector.load %arg16[%c0_39, %c0_40, %c0_41] : memref<3x16x128xf32, #tpu.memory_space<vmem>>, vector<1x16x128xf32>
      %67 = vector.shape_cast %66 : vector<1x16x128xf32> to vector<16x128xf32>
      %68 = vector.shape_cast %65 : vector<16x128xf32> to vector<1x16x128xf32>
      tpu.vector_store %arg16[%c0_39, %c0_40, %c0_41], %68 {strides = array<i32>} : memref<3x16x128xf32, #tpu.memory_space<vmem>>, vector<1x16x128xf32>,
    } else {
    }
    %c0_i32_18 = arith.constant 0 : i32
    %37 = arith.cmpi eq, %arg2, %c0_i32_18 : i32
    %38 = arith.extui %37 : i1 to i32
    %c0_i32_19 = arith.constant 0 : i32
    %39 = arith.cmpi ne, %38, %c0_i32_19 : i32
    scf.if %39 {
      %59 = arith.index_cast %9 : i32 to index
      %60 = arith.index_cast %22 : i32 to index
      %c0_32 = arith.constant 0 : index
      %61 = vector.load %arg14[%59, %60, %c0_32] : memref<2x128x128xbf16, #tpu.memory_space<vmem>>, vector<1x128x128xbf16>
      %62 = vector.shape_cast %61 : vector<1x128x128xbf16> to vector<128x128xbf16>
      %63 = arith.extf %62 : vector<128x128xbf16> to vector<128x128xf32>
      %c0_33 = arith.constant 0 : index
      %c0_34 = arith.constant 0 : index
      %c0_35 = arith.constant 0 : index
      %64 = vector.load %arg10[%c0_33, %c0_34, %c0_35] : memref<1x1x128xf32, #tpu.memory_space<vmem>>, vector<1x1x128xf32>
      %65 = vector.shape_cast %64 : vector<1x1x128xf32> to vector<1x128xf32>
      %66 = vector.broadcast %65 : vector<1x128xf32> to vector<128x128xf32>
      %67 = arith.mulf %66, %63 : vector<128x128xf32>
      %c0_36 = arith.constant 0 : index
      %c0_37 = arith.constant 0 : index
      %68 = vector.load %arg15[%c0_36, %c0_37] : memref<128x128xf32, #tpu.memory_space<vmem>>, vector<128x128xf32>
      tpu.vector_store %arg15[%c0_36, %c0_37], %67 {strides = array<i32>} : memref<128x128xf32, #tpu.memory_space<vmem>>, vector<128x128xf32>,
    } else {
    }
    %40 = arith.index_cast %9 : i32 to index
    %41 = arith.index_cast %24 : i32 to index
    %c0 = arith.constant 0 : index
    %42 = vector.load %arg14[%40, %41, %c0] : memref<2x128x128xbf16, #tpu.memory_space<vmem>>, vector<1x128x128xbf16>
    %43 = vector.shape_cast %42 : vector<1x128x128xbf16> to vector<128x128xbf16>
    %c0_20 = arith.constant 0 : index
    %c0_21 = arith.constant 0 : index
    %44 = vector.load %arg15[%c0_20, %c0_21] : memref<128x128xf32, #tpu.memory_space<vmem>>, vector<128x128xf32>
    %c0_22 = arith.constant 0 : index
    %c0_23 = arith.constant 0 : index
    %45 = vector.load %arg5[%c0_22, %c0_23] : memref<128x128xbf16, #tpu.memory_space<vmem>>, vector<128x128xbf16>
    %cst = arith.constant dense<0.000000e+00> : vector<128x128xf32>
    %46 = tpu.matmul %45, %43, %cst {dimension_numbers = #tpu.dot_dimension_numbers<[1], [0], [0], [1], [0, 0, 1, 1], [], []>} : vector<128x128xbf16>, vector<128x128xbf16>, vector<128x128xf32> -> vector<128x128xf32>
    %47 = arith.addf %44, %46 : vector<128x128xf32>
    %c0_24 = arith.constant 0 : index
    %c0_25 = arith.constant 0 : index
    %48 = vector.load %arg15[%c0_24, %c0_25] : memref<128x128xf32, #tpu.memory_space<vmem>>, vector<128x128xf32>
    tpu.vector_store %arg15[%c0_24, %c0_25], %47 {strides = array<i32>} : memref<128x128xf32, #tpu.memory_space<vmem>>, vector<128x128xf32>,
    %c0_i32_26 = arith.constant 0 : i32
    %49 = arith.cmpi eq, %arg2, %c0_i32_26 : i32
    %50 = arith.extui %49 : i1 to i32
    %c0_i32_27 = arith.constant 0 : i32
    %51 = arith.cmpi ne, %50, %c0_i32_27 : i32
    scf.if %51 {
      %c0_32 = arith.constant 0 : index
      %c0_33 = arith.constant 0 : index
      %59 = vector.load %arg15[%c0_32, %c0_33] : memref<128x128xf32, #tpu.memory_space<vmem>>, vector<128x128xf32>
      %60 = arith.truncf %59 : vector<128x128xf32> to vector<128x128xbf16>
      %c0_34 = arith.constant 0 : index
      %c0_35 = arith.constant 0 : index
      %c0_36 = arith.constant 0 : index
      %61 = vector.load %arg6[%c0_34, %c0_35, %c0_36] : memref<1x128x128xbf16, #tpu.memory_space<vmem>>, vector<1x128x128xbf16>
      %62 = vector.shape_cast %61 : vector<1x128x128xbf16> to vector<128x128xbf16>
      %cst_37 = arith.constant dense<0.000000e+00> : vector<128x128xf32>
      %63 = tpu.matmul %60, %62, %cst_37 {dimension_numbers = #tpu.dot_dimension_numbers<[1], [0], [0], [1], [0, 0, 1, 1], [], []>} : vector<128x128xbf16>, vector<128x128xbf16>, vector<128x128xf32> -> vector<128x128xf32>
      %c0_38 = arith.constant 0 : index
      %c0_39 = arith.constant 0 : index
      %c0_40 = arith.constant 0 : index
      %64 = vector.load %arg7[%c0_38, %c0_39, %c0_40] : memref<1x1x128xf32, #tpu.memory_space<vmem>>, vector<1x1x128xf32>
      %65 = vector.shape_cast %64 : vector<1x1x128xf32> to vector<1x128xf32>
      %66 = vector.broadcast %65 : vector<1x128xf32> to vector<128x128xf32>
      %67 = arith.addf %63, %66 : vector<128x128xf32>
      %cst_41 = arith.constant 0.000000e+00 : f32
      %68 = vector.broadcast %cst_41 : f32 to vector<128x128xf32>
      %69 = arith.maximumf %67, %68 : vector<128x128xf32>
      %70 = arith.truncf %69 : vector<128x128xf32> to vector<128x128xbf16>
      %c0_42 = arith.constant 0 : index
      %c0_43 = arith.constant 0 : index
      %c0_44 = arith.constant 0 : index
      %71 = vector.load %arg8[%c0_42, %c0_43, %c0_44] : memref<1x128x128xbf16, #tpu.memory_space<vmem>>, vector<1x128x128xbf16>
      %72 = vector.shape_cast %71 : vector<1x128x128xbf16> to vector<128x128xbf16>
      %cst_45 = arith.constant dense<0.000000e+00> : vector<128x128xf32>
      %73 = tpu.matmul %70, %72, %cst_45 {dimension_numbers = #tpu.dot_dimension_numbers<[1], [0], [0], [1], [0, 0, 1, 1], [], []>} : vector<128x128xbf16>, vector<128x128xbf16>, vector<128x128xf32> -> vector<128x128xf32>
      %c0_46 = arith.constant 0 : index
      %c0_47 = arith.constant 0 : index
      %c0_48 = arith.constant 0 : index
      %74 = vector.load %arg9[%c0_46, %c0_47, %c0_48] : memref<1x1x128xf32, #tpu.memory_space<vmem>>, vector<1x1x128xf32>
      %75 = vector.shape_cast %74 : vector<1x1x128xf32> to vector<1x128xf32>
      %76 = vector.broadcast %75 : vector<1x128xf32> to vector<128x128xf32>
      %77 = arith.addf %73, %76 : vector<128x128xf32>
      %cst_49 = arith.constant 0.000000e+00 : f32
      %78 = vector.broadcast %cst_49 : f32 to vector<128x128xf32>
      %79 = arith.maximumf %77, %78 : vector<128x128xf32>
      %80 = arith.truncf %79 : vector<128x128xf32> to vector<128x128xbf16>
      %81 = arith.index_cast %20 : i32 to index
      %82 = arith.index_cast %22 : i32 to index
      %c0_50 = arith.constant 0 : index
      %83 = vector.load %arg14[%81, %82, %c0_50] : memref<2x128x128xbf16, #tpu.memory_space<vmem>>, vector<1x128x128xbf16>
      %84 = vector.shape_cast %83 : vector<1x128x128xbf16> to vector<128x128xbf16>
      %85 = vector.shape_cast %80 : vector<128x128xbf16> to vector<1x128x128xbf16>
      tpu.vector_store %arg14[%81, %82, %c0_50], %85 {strides = array<i32>} : memref<2x128x128xbf16, #tpu.memory_space<vmem>>, vector<1x128x128xbf16>,
      %c1_i32_51 = arith.constant 1 : i32
      %86 = arith.addi %arg0, %c1_i32_51 : i32
      %87 = arith.index_cast %86 : i32 to index
      %c0_52 = arith.constant 0 : index
      %c0_53 = arith.constant 0 : index
      %88 = vector.load %arg16[%87, %c0_52, %c0_53] : memref<3x16x128xf32, #tpu.memory_space<vmem>>, vector<1x16x128xf32>
      %89 = vector.shape_cast %88 : vector<1x16x128xf32> to vector<16x128xf32>
      %c0_54 = arith.constant 0 : index
      %c0_55 = arith.constant 0 : index
      %90 = vector.load %arg4[%c0_54, %c0_55] : memref<16x128xbf16, #tpu.memory_space<vmem>>, vector<16x128xbf16>
      %cst_56 = arith.constant dense<0.000000e+00> : vector<16x128xf32>
      %91 = tpu.matmul %90, %80, %cst_56 {dimension_numbers = #tpu.dot_dimension_numbers<[1], [0], [0], [1], [0, 0, 1, 1], [], []>} : vector<16x128xbf16>, vector<128x128xbf16>, vector<16x128xf32> -> vector<16x128xf32>
      %92 = arith.addf %89, %91 : vector<16x128xf32>
      %c1_i32_57 = arith.constant 1 : i32
      %93 = arith.addi %arg0, %c1_i32_57 : i32
      %94 = arith.index_cast %93 : i32 to index
      %c0_58 = arith.constant 0 : index
      %c0_59 = arith.constant 0 : index
      %95 = vector.load %arg16[%94, %c0_58, %c0_59] : memref<3x16x128xf32, #tpu.memory_space<vmem>>, vector<1x16x128xf32>
      %96 = vector.shape_cast %95 : vector<1x16x128xf32> to vector<16x128xf32>
      %97 = vector.shape_cast %92 : vector<16x128xf32> to vector<1x16x128xf32>
      tpu.vector_store %arg16[%94, %c0_58, %c0_59], %97 {strides = array<i32>} : memref<3x16x128xf32, #tpu.memory_space<vmem>>, vector<1x16x128xf32>,
    } else {
    }
    %c1_i32_28 = arith.constant 1 : i32
    %52 = arith.cmpi eq, %arg0, %c1_i32_28 : i32
    %c0_i32_29 = arith.constant 0 : i32
    %53 = arith.cmpi eq, %arg1, %c0_i32_29 : i32
    %54 = arith.andi %52, %53 : i1
    %c0_i32_30 = arith.constant 0 : i32
    %55 = arith.cmpi eq, %arg2, %c0_i32_30 : i32
    %56 = arith.andi %54, %55 : i1
    %57 = arith.extui %56 : i1 to i32
    %c0_i32_31 = arith.constant 0 : i32
    %58 = arith.cmpi ne, %57, %c0_i32_31 : i32
    scf.if %58 {
      %c0_32 = arith.constant 0 : index
      %c0_33 = arith.constant 0 : index
      %c0_34 = arith.constant 0 : index
      %59 = vector.load %arg16[%c0_32, %c0_33, %c0_34] : memref<3x16x128xf32, #tpu.memory_space<vmem>>, vector<1x16x128xf32>
      %60 = vector.shape_cast %59 : vector<1x16x128xf32> to vector<16x128xf32>
      %c1 = arith.constant 1 : index
      %c0_35 = arith.constant 0 : index
      %c0_36 = arith.constant 0 : index
      %61 = vector.load %arg16[%c1, %c0_35, %c0_36] : memref<3x16x128xf32, #tpu.memory_space<vmem>>, vector<1x16x128xf32>
      %62 = vector.shape_cast %61 : vector<1x16x128xf32> to vector<16x128xf32>
      %c2 = arith.constant 2 : index
      %c0_37 = arith.constant 0 : index
      %c0_38 = arith.constant 0 : index
      %63 = vector.load %arg16[%c2, %c0_37, %c0_38] : memref<3x16x128xf32, #tpu.memory_space<vmem>>, vector<1x16x128xf32>
      %64 = vector.shape_cast %63 : vector<1x16x128xf32> to vector<16x128xf32>
      %65 = tpu.concatenate %60, %62, %64 in 1 : vector<16x128xf32>, vector<16x128xf32>, vector<16x128xf32> -> vector<16x384xf32>
      %66 = arith.truncf %65 : vector<16x384xf32> to vector<16x384xbf16>
      %c0_39 = arith.constant 0 : index
      %c0_40 = arith.constant 0 : index
      %67 = vector.load %arg11[%c0_39, %c0_40] : memref<384x128xbf16, #tpu.memory_space<vmem>>, vector<384x128xbf16>
      %cst_41 = arith.constant dense<0.000000e+00> : vector<16x128xf32>
      %68 = tpu.matmul %66, %67, %cst_41 {dimension_numbers = #tpu.dot_dimension_numbers<[1], [0], [0], [1], [0, 0, 1, 1], [], []>} : vector<16x384xbf16>, vector<384x128xbf16>, vector<16x128xf32> -> vector<16x128xf32>
      %c0_42 = arith.constant 0 : index
      %c0_43 = arith.constant 0 : index
      %69 = vector.load %arg12[%c0_42, %c0_43] : memref<1x128xf32, #tpu.memory_space<vmem>>, vector<1x128xf32>
      %70 = vector.broadcast %69 : vector<1x128xf32> to vector<16x128xf32>
      %71 = arith.addf %68, %70 : vector<16x128xf32>
      %c0_44 = arith.constant 0 : index
      %c0_45 = arith.constant 0 : index
      %72 = vector.load %arg13[%c0_44, %c0_45] : memref<16x128xf32, #tpu.memory_space<vmem>>, vector<16x128xf32>
      tpu.vector_store %arg13[%c0_44, %c0_45], %71 {strides = array<i32>} : memref<16x128xf32, #tpu.memory_space<vmem>>, vector<16x128xf32>,
    } else {
    }
    return
  }
  func.func @transform_0(%arg0: i32, %arg1: i32, %arg2: i32) -> (i32, i32) {
    %c0_i32 = arith.constant 0 : i32
    %c0_i32_0 = arith.constant 0 : i32
    %c0_i32_1 = arith.constant 0 : i32
    return %c0_i32, %c0_i32_0 : i32, i32
  }
  func.func @transform_1(%arg0: i32, %arg1: i32, %arg2: i32) -> (i32, i32) {
    %c0_i32 = arith.constant 0 : i32
    %c0_i32_0 = arith.constant 0 : i32
    return %c0_i32, %arg1 : i32, i32
  }
  func.func @transform_2(%arg0: i32, %arg1: i32, %arg2: i32) -> (i32, i32) {
    %c0_i32 = arith.constant 0 : i32
    return %arg1, %arg2 : i32, i32
  }
  func.func @transform_3(%arg0: i32, %arg1: i32, %arg2: i32) -> (i32, i32, i32) {
    %c0_i32 = arith.constant 0 : i32
    %c0_i32_0 = arith.constant 0 : i32
    %c0_i32_1 = arith.constant 0 : i32
    return %arg0, %c0_i32, %c0_i32_0 : i32, i32, i32
  }
  func.func @transform_4(%arg0: i32, %arg1: i32, %arg2: i32) -> (i32, i32, i32) {
    %c0_i32 = arith.constant 0 : i32
    %c0_i32_0 = arith.constant 0 : i32
    %c0_i32_1 = arith.constant 0 : i32
    return %arg0, %c0_i32, %c0_i32_0 : i32, i32, i32
  }
  func.func @transform_5(%arg0: i32, %arg1: i32, %arg2: i32) -> (i32, i32, i32) {
    %c0_i32 = arith.constant 0 : i32
    %c0_i32_0 = arith.constant 0 : i32
    %c0_i32_1 = arith.constant 0 : i32
    return %arg0, %c0_i32, %c0_i32_0 : i32, i32, i32
  }
  func.func @transform_6(%arg0: i32, %arg1: i32, %arg2: i32) -> (i32, i32, i32) {
    %c0_i32 = arith.constant 0 : i32
    %c0_i32_0 = arith.constant 0 : i32
    %c0_i32_1 = arith.constant 0 : i32
    return %arg0, %c0_i32, %c0_i32_0 : i32, i32, i32
  }
  func.func @transform_7(%arg0: i32, %arg1: i32, %arg2: i32) -> (i32, i32, i32) {
    %c0_i32 = arith.constant 0 : i32
    %c0_i32_0 = arith.constant 0 : i32
    %c0_i32_1 = arith.constant 0 : i32
    return %arg0, %c0_i32, %c0_i32_0 : i32, i32, i32
  }
  func.func @transform_8(%arg0: i32, %arg1: i32, %arg2: i32) -> (i32, i32) {
    %c0_i32 = arith.constant 0 : i32
    %c0_i32_0 = arith.constant 0 : i32
    %c0_i32_1 = arith.constant 0 : i32
    return %c0_i32, %c0_i32_0 : i32, i32
  }
  func.func @transform_9(%arg0: i32, %arg1: i32, %arg2: i32) -> (i32, i32) {
    %c0_i32 = arith.constant 0 : i32
    %c0_i32_0 = arith.constant 0 : i32
    %c0_i32_1 = arith.constant 0 : i32
    return %c0_i32, %c0_i32_0 : i32, i32
  }
  func.func @transform_10(%arg0: i32, %arg1: i32, %arg2: i32) -> (i32, i32) {
    %c0_i32 = arith.constant 0 : i32
    %c0_i32_0 = arith.constant 0 : i32
    %c0_i32_1 = arith.constant 0 : i32
    return %c0_i32, %c0_i32_0 : i32, i32
  }
}

</mosaic_0001>

<llo_original>
// kernel: forward.1
$region0: #{forward.1}
  #allocation0 [shape = 'u32[]', space=smem, size = 0x4, offset = 0x4, fixed_abs, tag = 'smem constant byte address 0x4 - core index']
  #allocation1 [shape = 'u32[144,128]{1,0:T(1,128)}', space=vmem, size = 0x12000, scoped, tag = 'internal scratch']
  #allocation2 [shape = 'bf16[2,128,128]{2,1,0:T(16,128)(2,1)}', space=vmem, size = 0x10000, scoped, tag = 'scratch operand']
  #allocation3 [shape = 'f32[128,128]{1,0:T(8,128)}', space=vmem, size = 0x10000, scoped, tag = 'scratch operand']
  #allocation4 [shape = 'f32[3,16,128]{2,1,0:T(8,128)}', space=vmem, size = 0x6000, scoped, tag = 'scratch operand']
  %s0 = inlined_call_operand.hbm [shape: bf16[128,128], index: 0, kind: input, shape index: {}]
  %s1 = inlined_call_operand.hbm [shape: bf16[16,128], index: 1, kind: input, shape index: {}]
  %s2 = inlined_call_operand.hbm [shape: bf16[128,128], index: 2, kind: input, shape index: {}]
  %s3 = inlined_call_operand.hbm [shape: bf16[2,128,128], index: 3, kind: input, shape index: {}]
  %s4 = inlined_call_operand.hbm [shape: f32[2,1,128], index: 4, kind: input, shape index: {}]
  %s5 = inlined_call_operand.hbm [shape: bf16[2,128,128], index: 5, kind: input, shape index: {}]
  %s6 = inlined_call_operand.hbm [shape: f32[2,1,128], index: 6, kind: input, shape index: {}]
  %s7 = inlined_call_operand.hbm [shape: f32[2,1,128], index: 7, kind: input, shape index: {}]
  %s8 = inlined_call_operand.hbm [shape: bf16[384,128], index: 8, kind: input, shape index: {}]
  %s9 = inlined_call_operand.hbm [shape: f32[1,128], index: 9, kind: input, shape index: {}]
  %s10 = inlined_call_operand.hbm [shape: f32[16,128], index: 10, kind: output, shape index: {}]
  %s11 = sld [smem:[#allocation0]]
  $region133: #{forward.1} parent=0
    _
  %s13 = ssub.s32 1, %s11
  %s14 = scalar_select 0, %s13, %s11
  $region1: #{forward.1} parent=0
    #allocation5 [shape = 'u8[32768]{0}', space=vmem, size = 0x8000, scoped, tag = 'input window, operand 0, single buffered']
    #allocation6 [shape = 's32[2]{0}', space=sflag, size = 0x8, scoped, tag = 'scoped memory for forward.1']
    #allocation7 [shape = 's32[2]{0}', space=sflag, size = 0x8, scoped, tag = 'scoped memory for forward.1']
    #allocation8 [shape = 'u8[4096]{0}', space=vmem, size = 0x1000, scoped, tag = 'input window, operand 1, single buffered']
    #allocation9 [shape = 's32[1]{0}', space=sflag, size = 0x4, scoped, tag = 'scoped memory for forward.1']
    #allocation10 [shape = 'u8[32768]{0}', space=vmem, size = 0x8000, scoped, tag = 'input window, operand 2, single buffered']
    #allocation11 [shape = 'u8[65536]{0}', space=vmem, size = 0x10000, scoped, tag = 'input window, operand 3']
    #allocation12 [shape = 's32[2]{0}', space=sflag, size = 0x8, scoped, tag = 'scoped memory for forward.1']
    #allocation13 [shape = 'u8[1024]{0}', space=vmem, size = 0x400, scoped, tag = 'input window, operand 4']
    #allocation14 [shape = 'u8[65536]{0}', space=vmem, size = 0x10000, scoped, tag = 'input window, operand 5']
    #allocation15 [shape = 's32[2]{0}', space=sflag, size = 0x8, scoped, tag = 'scoped memory for forward.1']
    #allocation16 [shape = 'u8[1024]{0}', space=vmem, size = 0x400, scoped, tag = 'input window, operand 6']
    #allocation17 [shape = 'u8[1024]{0}', space=vmem, size = 0x400, scoped, tag = 'input window, operand 7']
    #allocation18 [shape = 's32[2]{0}', space=sflag, size = 0x8, scoped, tag = 'scoped memory for forward.1']
    #allocation19 [shape = 'u8[98304]{0}', space=vmem, size = 0x18000, scoped, tag = 'input window, operand 8, single buffered']
    #allocation20 [shape = 'u8[512]{0}', space=vmem, size = 0x400, scoped, tag = 'input window, operand 9, single buffered']
    #allocation21 [shape = 's32[1]{0}', space=sflag, size = 0x4, scoped, tag = 'scoped memory for forward.1']
    #allocation22 [shape = 'u8[8192]{0}', space=vmem, size = 0x2000, scoped, tag = 'output window, operand 0, single buffered']
    %15 = vsyncpa [#allocation6], 0
    %16 = vsyncpa [#allocation9], 0
    %17 = vsyncpa [#allocation12], 0
    %s18 = scalar_lea.sflag [#allocation12], 1
    %19 = vsyncpa %s18, 0
    %20 = vsyncpa [#allocation15], 0
    %s21 = scalar_lea.sflag [#allocation15], 1
    %22 = vsyncpa %s21, 0
    %23 = vsyncpa [#allocation18], 0
    %s24 = scalar_lea.sflag [#allocation18], 1
    %25 = vsyncpa %s24, 0
    %26 = vsyncpa [#allocation21], 0
    %27 = vsyncpa [#allocation7], 0
    loop: start=0, step=1, limit=4
    $region2: #{forward.1} parent=1 // loop_pre_header
      _
    $region3: #{forward.1} parent=1 // loop_header
      %s29 = sphi 0, %s33
      %p30 = scmp.ge.s32.totalorder %s29, 4
      %s36 = sphi 0, %s55
      %s37 = sphi 0, %s51
      %s38 = sphi 0, %s47
      %s39 = sphi 0, %s36
      %s40 = sphi 0, %s37
      %s41 = sphi 0, %s38
      %s42 = sphi 0, %s39
      %s43 = sphi 0, %s40
      %s44 = sphi 0, %s41
      %s56 = sphi 0, %s56
      %s58 = sphi 0, %s56
      %s59 = sphi 0, %s58
      %s73 = sphi 0, %s59
      %s79 = sphi 0, %s81
      %s82 = sphi 0, %s79
      %s83 = sphi 0, %s82
      %s99 = sphi 0, %s83
      %s107 = sphi 0, %s109
      %s110 = sphi 0, %s107
      %s111 = sphi 0, %s110
      %s127 = sphi 0, %s111
      %s133 = sphi 0, %s135
      %s136 = sphi 0, %s133
      %s137 = sphi 0, %s136
      %s153 = sphi 0, %s137
      %s159 = sphi 0, %s161
      %s162 = sphi 0, %s159
      %s163 = sphi 0, %s162
      %s179 = sphi 0, %s163
      %s185 = sphi 0, %s187
      %s188 = sphi 0, %s185
      %s189 = sphi 0, %s188
      %s205 = sphi 0, %s189
      %s211 = sphi 0, %s213
      %s214 = sphi 0, %s211
      %s215 = sphi 0, %s214
      %s231 = sphi 0, %s215
      %s237 = sphi 0, %s239
      %s240 = sphi 0, %s237
      %s241 = sphi 0, %s240
      %s257 = sphi 0, %s241
      %s261 = sphi 0, %s261
      %s263 = sphi 0, %s261
      %s264 = sphi 0, %s263
      %s278 = sphi 0, %s264
      %s282 = sphi 0, %s282
      %s284 = sphi 0, %s282
      %s285 = sphi 0, %s284
      %s299 = sphi 0, %s285
      %s303 = sphi 0, %s303
      %s305 = sphi 0, %s303
      %s306 = sphi 0, %s305
      %s320 = sphi 0, %s306
    $region4: #{forward.1} parent=1 // loop_header_branch
      %32 = sbr.rel (%p30) target = $region8
    $region5: #{forward.1} parent=1 // loop_body
      %s34 = ssub.s32 %s29, 1
      %s35 = ssub.s32 %s29, 2
      %s45 = sadd.s32 1, %s38
      %p46 = scmp.ge.s32.totalorder %s45, 1
      %s47 = scalar_select %p46, 0, %s45
      %s48 = sadd.s32 1, %s37
      %s49 = scalar_select %p46, %s48, %s37
      %p50 = scmp.ge.s32.totalorder %s49, 1
      %s51 = scalar_select %p50, 0, %s49
      %s52 = sadd.s32 1, %s36
      %s53 = scalar_select %p50, %s52, %s36
      %p54 = scmp.ge.s32.totalorder %s53, 2
      %s55 = scalar_select %p54, 0, %s53
      %s57 = sadd.s32 %s56, 1
      %p60 = scmp.eq.s32.totalorder %s29, 1
      %p61 = scmp.ne.s32.totalorder %s56, %s58
      %p62 = scmp.eq.s32.totalorder %s29, 0
      %p63 = por %p61, %p62
      %p64 = scmp.ne.s32.totalorder %s56, %s58
      %p65 = scmp.eq.s32.totalorder %s34, 1
      %p66 = por %p64, %p65
      %p67 = scmp.ne.s32.totalorder %s58, %s59
      %p68 = scmp.eq.s32.totalorder %s34, 0
      %p69 = por %p67, %p68
      %p70 = scmp.ne.s32.totalorder %s58, %s59
      %p71 = scmp.eq.s32.totalorder %s35, 1
      %p72 = por %p70, %p71
      %p74 = scmp.ne.s32.totalorder %s59, %s73
      %p75 = scmp.eq.s32.totalorder %s35, 0
      %p76 = por %p74, %p75
      %s77 = ssub.s32 %s37, %s51
      %p78 = scmp.eq.s32.totalorder %s77, 0
      %s80 = sadd.s32 %s79, 1
      %s81 = scalar_select %p78, %s79, %s80
      %p84 = pneg %p78
      %p85 = scmp.eq.s32.totalorder %s29, 1
      %p86 = por %p84, %p85
      %p87 = scmp.ne.s32.totalorder %s79, %s82
      %p88 = scmp.eq.s32.totalorder %s29, 0
      %p89 = por %p87, %p88
      %p90 = scmp.ne.s32.totalorder %s79, %s82
      %p91 = scmp.eq.s32.totalorder %s34, 1
      %p92 = por %p90, %p91
      %p93 = scmp.ne.s32.totalorder %s82, %s83
      %p94 = scmp.eq.s32.totalorder %s34, 0
      %p95 = por %p93, %p94
      %p96 = scmp.ne.s32.totalorder %s82, %s83
      %p97 = scmp.eq.s32.totalorder %s35, 1
      %p98 = por %p96, %p97
      %p100 = scmp.ne.s32.totalorder %s83, %s99
      %p101 = scmp.eq.s32.totalorder %s35, 0
      %p102 = por %p100, %p101
      %s103 = ssub.s32 %s37, %s51
      %s104 = ssub.s32 %s38, %s47
      %s105 = sor.u32 %s103, %s104
      %p106 = scmp.eq.s32.totalorder %s105, 0
      %s108 = sadd.s32 %s107, 1
      %s109 = scalar_select %p106, %s107, %s108
      %p112 = pneg %p106
      %p113 = scmp.eq.s32.totalorder %s29, 1
      %p114 = por %p112, %p113
      %p115 = scmp.ne.s32.totalorder %s107, %s110
      %p116 = scmp.eq.s32.totalorder %s29, 0
      %p117 = por %p115, %p116
      %p118 = scmp.ne.s32.totalorder %s107, %s110
      %p119 = scmp.eq.s32.totalorder %s34, 1
      %p120 = por %p118, %p119
      %p121 = scmp.ne.s32.totalorder %s110, %s111
      %p122 = scmp.eq.s32.totalorder %s34, 0
      %p123 = por %p121, %p122
      %p124 = scmp.ne.s32.totalorder %s110, %s111
      %p125 = scmp.eq.s32.totalorder %s35, 1
      %p126 = por %p124, %p125
      %p128 = scmp.ne.s32.totalorder %s111, %s127
      %p129 = scmp.eq.s32.totalorder %s35, 0
      %p130 = por %p128, %p129
      %s131 = ssub.s32 %s36, %s55
      %p132 = scmp.eq.s32.totalorder %s131, 0
      %s134 = sadd.s32 %s133, 1
      %s135 = scalar_select %p132, %s133, %s134
      %p138 = pneg %p132
      %p139 = scmp.eq.s32.totalorder %s29, 1
      %p140 = por %p138, %p139
      %p141 = scmp.ne.s32.totalorder %s133, %s136
      %p142 = scmp.eq.s32.totalorder %s29, 0
      %p143 = por %p141, %p142
      %p144 = scmp.ne.s32.totalorder %s133, %s136
      %p145 = scmp.eq.s32.totalorder %s34, 1
      %p146 = por %p144, %p145
      %p147 = scmp.ne.s32.totalorder %s136, %s137
      %p148 = scmp.eq.s32.totalorder %s34, 0
      %p149 = por %p147, %p148
      %p150 = scmp.ne.s32.totalorder %s136, %s137
      %p151 = scmp.eq.s32.totalorder %s35, 1
      %p152 = por %p150, %p151
      %p154 = scmp.ne.s32.totalorder %s137, %s153
      %p155 = scmp.eq.s32.totalorder %s35, 0
      %p156 = por %p154, %p155
      %s157 = ssub.s32 %s36, %s55
      %p158 = scmp.eq.s32.totalorder %s157, 0
      %s160 = sadd.s32 %s159, 1
      %s161 = scalar_select %p158, %s159, %s160
      %p164 = pneg %p158
      %p165 = scmp.eq.s32.totalorder %s29, 1
      %p166 = por %p164, %p165
      %p167 = scmp.ne.s32.totalorder %s159, %s162
      %p168 = scmp.eq.s32.totalorder %s29, 0
      %p169 = por %p167, %p168
      %p170 = scmp.ne.s32.totalorder %s159, %s162
      %p171 = scmp.eq.s32.totalorder %s34, 1
      %p172 = por %p170, %p171
      %p173 = scmp.ne.s32.totalorder %s162, %s163
      %p174 = scmp.eq.s32.totalorder %s34, 0
      %p175 = por %p173, %p174
      %p176 = scmp.ne.s32.totalorder %s162, %s163
      %p177 = scmp.eq.s32.totalorder %s35, 1
      %p178 = por %p176, %p177
      %p180 = scmp.ne.s32.totalorder %s163, %s179
      %p181 = scmp.eq.s32.totalorder %s35, 0
      %p182 = por %p180, %p181
      %s183 = ssub.s32 %s36, %s55
      %p184 = scmp.eq.s32.totalorder %s183, 0
      %s186 = sadd.s32 %s185, 1
      %s187 = scalar_select %p184, %s185, %s186
      %p190 = pneg %p184
      %p191 = scmp.eq.s32.totalorder %s29, 1
      %p192 = por %p190, %p191
      %p193 = scmp.ne.s32.totalorder %s185, %s188
      %p194 = scmp.eq.s32.totalorder %s29, 0
      %p195 = por %p193, %p194
      %p196 = scmp.ne.s32.totalorder %s185, %s188
      %p197 = scmp.eq.s32.totalorder %s34, 1
      %p198 = por %p196, %p197
      %p199 = scmp.ne.s32.totalorder %s188, %s189
      %p200 = scmp.eq.s32.totalorder %s34, 0
      %p201 = por %p199, %p200
      %p202 = scmp.ne.s32.totalorder %s188, %s189
      %p203 = scmp.eq.s32.totalorder %s35, 1
      %p204 = por %p202, %p203
      %p206 = scmp.ne.s32.totalorder %s189, %s205
      %p207 = scmp.eq.s32.totalorder %s35, 0
      %p208 = por %p206, %p207
      %s209 = ssub.s32 %s36, %s55
      %p210 = scmp.eq.s32.totalorder %s209, 0
      %s212 = sadd.s32 %s211, 1
      %s213 = scalar_select %p210, %s211, %s212
      %p216 = pneg %p210
      %p217 = scmp.eq.s32.totalorder %s29, 1
      %p218 = por %p216, %p217
      %p219 = scmp.ne.s32.totalorder %s211, %s214
      %p220 = scmp.eq.s32.totalorder %s29, 0
      %p221 = por %p219, %p220
      %p222 = scmp.ne.s32.totalorder %s211, %s214
      %p223 = scmp.eq.s32.totalorder %s34, 1
      %p224 = por %p222, %p223
      %p225 = scmp.ne.s32.totalorder %s214, %s215
      %p226 = scmp.eq.s32.totalorder %s34, 0
      %p227 = por %p225, %p226
      %p228 = scmp.ne.s32.totalorder %s214, %s215
      %p229 = scmp.eq.s32.totalorder %s35, 1
      %p230 = por %p228, %p229
      %p232 = scmp.ne.s32.totalorder %s215, %s231
      %p233 = scmp.eq.s32.totalorder %s35, 0
      %p234 = por %p232, %p233
      %s235 = ssub.s32 %s36, %s55
      %p236 = scmp.eq.s32.totalorder %s235, 0
      %s238 = sadd.s32 %s237, 1
      %s239 = scalar_select %p236, %s237, %s238
      %p242 = pneg %p236
      %p243 = scmp.eq.s32.totalorder %s29, 1
      %p244 = por %p242, %p243
      %p245 = scmp.ne.s32.totalorder %s237, %s240
      %p246 = scmp.eq.s32.totalorder %s29, 0
      %p247 = por %p245, %p246
      %p248 = scmp.ne.s32.totalorder %s237, %s240
      %p249 = scmp.eq.s32.totalorder %s34, 1
      %p250 = por %p248, %p249
      %p251 = scmp.ne.s32.totalorder %s240, %s241
      %p252 = scmp.eq.s32.totalorder %s34, 0
      %p253 = por %p251, %p252
      %p254 = scmp.ne.s32.totalorder %s240, %s241
      %p255 = scmp.eq.s32.totalorder %s35, 1
      %p256 = por %p254, %p255
      %p258 = scmp.ne.s32.totalorder %s241, %s257
      %p259 = scmp.eq.s32.totalorder %s35, 0
      %p260 = por %p258, %p259
      %s262 = sadd.s32 %s261, 1
      %p265 = scmp.eq.s32.totalorder %s29, 1
      %p266 = scmp.ne.s32.totalorder %s261, %s263
      %p267 = scmp.eq.s32.totalorder %s29, 0
      %p268 = por %p266, %p267
      %p269 = scmp.ne.s32.totalorder %s261, %s263
      %p270 = scmp.eq.s32.totalorder %s34, 1
      %p271 = por %p269, %p270
      %p272 = scmp.ne.s32.totalorder %s263, %s264
      %p273 = scmp.eq.s32.totalorder %s34, 0
      %p274 = por %p272, %p273
      %p275 = scmp.ne.s32.totalorder %s263, %s264
      %p276 = scmp.eq.s32.totalorder %s35, 1
      %p277 = por %p275, %p276
      %p279 = scmp.ne.s32.totalorder %s264, %s278
      %p280 = scmp.eq.s32.totalorder %s35, 0
      %p281 = por %p279, %p280
      %s283 = sadd.s32 %s282, 1
      %p286 = scmp.eq.s32.totalorder %s29, 1
      %p287 = scmp.ne.s32.totalorder %s282, %s284
      %p288 = scmp.eq.s32.totalorder %s29, 0
      %p289 = por %p287, %p288
      %p290 = scmp.ne.s32.totalorder %s282, %s284
      %p291 = scmp.eq.s32.totalorder %s34, 1
      %p292 = por %p290, %p291
      %p293 = scmp.ne.s32.totalorder %s284, %s285
      %p294 = scmp.eq.s32.totalorder %s34, 0
      %p295 = por %p293, %p294
      %p296 = scmp.ne.s32.totalorder %s284, %s285
      %p297 = scmp.eq.s32.totalorder %s35, 1
      %p298 = por %p296, %p297
      %p300 = scmp.ne.s32.totalorder %s285, %s299
      %p301 = scmp.eq.s32.totalorder %s35, 0
      %p302 = por %p300, %p301
      %s304 = sadd.s32 %s303, 1
      %p307 = scmp.eq.s32.totalorder %s29, 1
      %p308 = scmp.ne.s32.totalorder %s303, %s305
      %p309 = scmp.eq.s32.totalorder %s29, 0
      %p310 = por %p308, %p309
      %p311 = scmp.ne.s32.totalorder %s303, %s305
      %p312 = scmp.eq.s32.totalorder %s34, 1
      %p313 = por %p311, %p312
      %p314 = scmp.ne.s32.totalorder %s305, %s306
      %p315 = scmp.eq.s32.totalorder %s34, 0
      %p316 = por %p314, %p315
      %p317 = scmp.ne.s32.totalorder %s305, %s306
      %p318 = scmp.eq.s32.totalorder %s35, 1
      %p319 = por %p317, %p318
      %p321 = scmp.ne.s32.totalorder %s306, %s320
      %p322 = scmp.eq.s32.totalorder %s35, 0
      %p323 = por %p321, %p322
      %p324 = scmp.le.s32.totalorder 1, %s29
      %p325 = scmp.lt.s32.totalorder %s29, 3
      %p326 = pnand %p324, %p325
      %p327 = pneg %p326
      // Predicated region
      $region9: #{forward.1} parent=5 // pred_check
        _
      $region10: #{forward.1} parent=5 // pred_check_branch
        %329 = sbr.rel (%p326) target = $region12
      $region11: #{forward.1} parent=5 // pred_region
        %s330 = ssub.s32 %s29, 1
        // Predicated region
        $region13: #{forward.1} parent=11 // pred_check
          %p331 = pneg %p69
        $region14: #{forward.1} parent=11 // pred_check_branch
          %333 = sbr.rel (%p331) target = $region16
        $region15: #{forward.1} parent=11 // pred_region
          %s335 = ssub.s32 1024, 1024
          %336 = vsyncadd [#allocation6], %s335
          %s337 = sshll.u32 [#allocation5], 4
          %s338 = int_to_ptr.vmem [resolvable:$true] %s337
          %343 = dma.hbm_to_vmem [thread:$0]  %s0, 1024, %s338, [#allocation6], 64, 64, 4
        $region16: #{forward.1} parent=11 // pred_fallthru
          _
        // Predicated region
        $region17: #{forward.1} parent=11 // pred_check
          %p344 = pneg %p95
        $region18: #{forward.1} parent=11 // pred_check_branch
          %346 = sbr.rel (%p344) target = $region20
        $region19: #{forward.1} parent=11 // pred_region
          %s348 = ssub.s32 128, 128
          %349 = vsyncadd [#allocation9], %s348
          %s350 = smul.addr %s40, 64
          %s351 = scalar_lea.hbm %s1, %s350
          %s352 = sshll.u32 [#allocation8], 4
          %s353 = int_to_ptr.vmem [resolvable:$true] %s352
          %358 = dma.hbm_to_vmem [thread:$0]  %s351, 128, %s353, [#allocation9], 64, 64, 4
        $region20: #{forward.1} parent=11 // pred_fallthru
          _
        // Predicated region
        $region21: #{forward.1} parent=11 // pred_check
          %p359 = pneg %p123
        $region22: #{forward.1} parent=11 // pred_check_branch
          %361 = sbr.rel (%p359) target = $region24
        $region23: #{forward.1} parent=11 // pred_region
          %s362 = smul.u32 16, %s40
          %s364 = ssub.s32 1024, 1024
          %365 = vsyncadd [#allocation9], %s364
          %s366 = sadd.s32 %s41, %s362
          %s367 = smul.addr %s366, 64
          %s368 = scalar_lea.hbm %s2, %s367
          %s369 = sshll.u32 [#allocation10], 4
          %s370 = int_to_ptr.vmem [resolvable:$true] %s369
          %375 = dma.hbm_to_vmem [thread:$0]  %s368, 1024, %s370, [#allocation9], 64, 64, 4
        $region24: #{forward.1} parent=11 // pred_fallthru
          _
        // Predicated region
        $region25: #{forward.1} parent=11 // pred_check
          %p376 = pneg %p274
        $region26: #{forward.1} parent=11 // pred_check_branch
          %378 = sbr.rel (%p376) target = $region28
        $region27: #{forward.1} parent=11 // pred_region
          %s380 = ssub.s32 3072, 3072
          %381 = vsyncadd [#allocation18], %s380
          %s382 = sshll.u32 [#allocation19], 4
          %s383 = int_to_ptr.vmem [resolvable:$true] %s382
          %388 = dma.hbm_to_vmem [thread:$0]  %s8, 3072, %s383, [#allocation18], 64, 64, 4
        $region28: #{forward.1} parent=11 // pred_fallthru
          _
        // Predicated region
        $region29: #{forward.1} parent=11 // pred_check
          %p389 = pneg %p295
        $region30: #{forward.1} parent=11 // pred_check_branch
          %391 = sbr.rel (%p389) target = $region32
        $region31: #{forward.1} parent=11 // pred_region
          %s393 = ssub.s32 16, 16
          %394 = vsyncadd [#allocation21], %s393
          %s396 = sshll.u32 [#allocation20], 4
          %s397 = int_to_ptr.vmem [resolvable:$true] %s396
          %399 = dma.hbm_to_vmem [thread:$0]  %s9, 16, %s397, [#allocation21]
        $region32: #{forward.1} parent=11 // pred_fallthru
          _
      $region12: #{forward.1} parent=5 // pred_fallthru
        _
      %p400 = scmp.lt.s32.totalorder %s29, 2
      // Predicated region
      $region33: #{forward.1} parent=5 // pred_check
        %p401 = pneg %p400
      $region34: #{forward.1} parent=5 // pred_check_branch
        %403 = sbr.rel (%p401) target = $region36
      $region35: #{forward.1} parent=5 // pred_region
        // Predicated region
        $region37: #{forward.1} parent=35 // pred_check
          %p404 = pneg %p143
        $region38: #{forward.1} parent=35 // pred_check_branch
          %406 = sbr.rel (%p404) target = $region40
        $region39: #{forward.1} parent=35 // pred_region
          %s407 = sand.u32 %s29, 1
          %s408 = scalar_lea.sflag [#allocation12], %s407
          %s409 = sand.u32 %s133, 1
          %s410 = smul.addr %s409, 64
          %s411 = scalar_lea.vmem [#allocation11], %s410
          %s413 = ssub.s32 1024, 1024
          %414 = vsyncadd %s408, %s413
          %s415 = smul.addr %s36, 16
          %s416 = smul.addr %s415, 64
          %s417 = scalar_lea.hbm %s3, %s416
          %s418 = sshll.u32 %s411, 4
          %s419 = int_to_ptr.vmem [resolvable:$true] %s418
          %424 = dma.hbm_to_vmem [thread:$0]  %s417, 1024, %s419, %s408, 64, 64, 4
        $region40: #{forward.1} parent=35 // pred_fallthru
          _
        // Predicated region
        $region41: #{forward.1} parent=35 // pred_check
          %p425 = pneg %p169
        $region42: #{forward.1} parent=35 // pred_check_branch
          %427 = sbr.rel (%p425) target = $region44
        $region43: #{forward.1} parent=35 // pred_region
          %s428 = sand.u32 %s29, 1
          %s429 = scalar_lea.sflag [#allocation12], %s428
          %s430 = sand.u32 %s159, 1
          %s431 = scalar_lea.vmem [#allocation13], %s430
          %s433 = ssub.s32 16, 16
          %434 = vsyncadd %s429, %s433
          %s435 = smul.addr %s36, 16
          %s436 = scalar_lea.hbm %s4, %s435
          %s438 = sshll.u32 %s431, 4
          %s439 = int_to_ptr.vmem [resolvable:$true] %s438
          %441 = dma.hbm_to_vmem [thread:$0]  %s436, 16, %s439, %s429
        $region44: #{forward.1} parent=35 // pred_fallthru
          _
        // Predicated region
        $region45: #{forward.1} parent=35 // pred_check
          %p442 = pneg %p195
        $region46: #{forward.1} parent=35 // pred_check_branch
          %444 = sbr.rel (%p442) target = $region48
        $region47: #{forward.1} parent=35 // pred_region
          %s445 = sand.u32 %s29, 1
          %s446 = scalar_lea.sflag [#allocation15], %s445
          %s447 = sand.u32 %s185, 1
          %s448 = smul.addr %s447, 64
          %s449 = scalar_lea.vmem [#allocation14], %s448
          %s451 = ssub.s32 1024, 1024
          %452 = vsyncadd %s446, %s451
          %s453 = smul.addr %s36, 16
          %s454 = smul.addr %s453, 64
          %s455 = scalar_lea.hbm %s5, %s454
          %s456 = sshll.u32 %s449, 4
          %s457 = int_to_ptr.vmem [resolvable:$true] %s456
          %462 = dma.hbm_to_vmem [thread:$0]  %s455, 1024, %s457, %s446, 64, 64, 4
        $region48: #{forward.1} parent=35 // pred_fallthru
          _
        // Predicated region
        $region49: #{forward.1} parent=35 // pred_check
          %p463 = pneg %p221
        $region50: #{forward.1} parent=35 // pred_check_branch
          %465 = sbr.rel (%p463) target = $region52
        $region51: #{forward.1} parent=35 // pred_region
          %s466 = sand.u32 %s29, 1
          %s467 = scalar_lea.sflag [#allocation15], %s466
          %s468 = sand.u32 %s211, 1
          %s469 = scalar_lea.vmem [#allocation16], %s468
          %s471 = ssub.s32 16, 16
          %472 = vsyncadd %s467, %s471
          %s473 = smul.addr %s36, 16
          %s474 = scalar_lea.hbm %s6, %s473
          %s476 = sshll.u32 %s469, 4
          %s477 = int_to_ptr.vmem [resolvable:$true] %s476
          %479 = dma.hbm_to_vmem [thread:$0]  %s474, 16, %s477, %s467
        $region52: #{forward.1} parent=35 // pred_fallthru
          _
        // Predicated region
        $region53: #{forward.1} parent=35 // pred_check
          %p480 = pneg %p247
        $region54: #{forward.1} parent=35 // pred_check_branch
          %482 = sbr.rel (%p480) target = $region56
        $region55: #{forward.1} parent=35 // pred_region
          %s483 = sand.u32 %s29, 1
          %s484 = scalar_lea.sflag [#allocation18], %s483
          %s485 = sand.u32 %s237, 1
          %s486 = scalar_lea.vmem [#allocation17], %s485
          %s488 = ssub.s32 16, 16
          %489 = vsyncadd %s484, %s488
          %s490 = smul.addr %s36, 16
          %s491 = scalar_lea.hbm %s7, %s490
          %s493 = sshll.u32 %s486, 4
          %s494 = int_to_ptr.vmem [resolvable:$true] %s493
          %496 = dma.hbm_to_vmem [thread:$0]  %s491, 16, %s494, %s484
        $region56: #{forward.1} parent=35 // pred_fallthru
          _
      $region36: #{forward.1} parent=5 // pred_fallthru
        _
      %p497 = scmp.le.s32.totalorder 1, %s29
      %p498 = scmp.lt.s32.totalorder %s29, 3
      %p499 = pnand %p497, %p498
      %p500 = pneg %p499
      // Predicated region
      $region57: #{forward.1} parent=5 // pred_check
        _
      $region58: #{forward.1} parent=5 // pred_check_branch
        %502 = sbr.rel (%p499) target = $region60
      $region59: #{forward.1} parent=5 // pred_region
        %s503 = ssub.s32 %s29, 1
        // Predicated region
        $region61: #{forward.1} parent=59 // pred_check
          %p504 = pneg %p69
        $region62: #{forward.1} parent=59 // pred_check_branch
          %506 = sbr.rel (%p504) target = $region64
        $region63: #{forward.1} parent=59 // pred_region
          %507 = dma.done [#allocation6], 1024
        $region64: #{forward.1} parent=59 // pred_fallthru
          _
        // Predicated region
        $region65: #{forward.1} parent=59 // pred_check
          %p508 = pneg %p95
        $region66: #{forward.1} parent=59 // pred_check_branch
          %510 = sbr.rel (%p508) target = $region68
        $region67: #{forward.1} parent=59 // pred_region
          %511 = dma.done [#allocation9], 128
        $region68: #{forward.1} parent=59 // pred_fallthru
          _
        // Predicated region
        $region69: #{forward.1} parent=59 // pred_check
          %p512 = pneg %p123
        $region70: #{forward.1} parent=59 // pred_check_branch
          %514 = sbr.rel (%p512) target = $region72
        $region71: #{forward.1} parent=59 // pred_region
          %515 = dma.done [#allocation9], 1024
        $region72: #{forward.1} parent=59 // pred_fallthru
          _
        %s516 = sand.u32 %s34, 1
        %s517 = scalar_lea.sflag [#allocation12], %s516
        %s518 = sand.u32 %s136, 1
        %s519 = smul.addr %s518, 64
        %s520 = scalar_lea.vmem [#allocation11], %s519
        // Predicated region
        $region73: #{forward.1} parent=59 // pred_check
          %p521 = pneg %p149
        $region74: #{forward.1} parent=59 // pred_check_branch
          %523 = sbr.rel (%p521) target = $region76
        $region75: #{forward.1} parent=59 // pred_region
          %524 = dma.done %s517, 1024
        $region76: #{forward.1} parent=59 // pred_fallthru
          _
        %s525 = sand.u32 %s34, 1
        %s526 = scalar_lea.sflag [#allocation12], %s525
        %s527 = sand.u32 %s162, 1
        %s528 = scalar_lea.vmem [#allocation13], %s527
        // Predicated region
        $region77: #{forward.1} parent=59 // pred_check
          %p529 = pneg %p175
        $region78: #{forward.1} parent=59 // pred_check_branch
          %531 = sbr.rel (%p529) target = $region80
        $region79: #{forward.1} parent=59 // pred_region
          %532 = dma.done %s526, 16
        $region80: #{forward.1} parent=59 // pred_fallthru
          _
        %s533 = sand.u32 %s34, 1
        %s534 = scalar_lea.sflag [#allocation15], %s533
        %s535 = sand.u32 %s188, 1
        %s536 = smul.addr %s535, 64
        %s537 = scalar_lea.vmem [#allocation14], %s536
        // Predicated region
        $region81: #{forward.1} parent=59 // pred_check
          %p538 = pneg %p201
        $region82: #{forward.1} parent=59 // pred_check_branch
          %540 = sbr.rel (%p538) target = $region84
        $region83: #{forward.1} parent=59 // pred_region
          %541 = dma.done %s534, 1024
        $region84: #{forward.1} parent=59 // pred_fallthru
          _
        %s542 = sand.u32 %s34, 1
        %s543 = scalar_lea.sflag [#allocation15], %s542
        %s544 = sand.u32 %s214, 1
        %s545 = scalar_lea.vmem [#allocation16], %s544
        // Predicated region
        $region85: #{forward.1} parent=59 // pred_check
          %p546 = pneg %p227
        $region86: #{forward.1} parent=59 // pred_check_branch
          %548 = sbr.rel (%p546) target = $region88
        $region87: #{forward.1} parent=59 // pred_region
          %549 = dma.done %s543, 16
        $region88: #{forward.1} parent=59 // pred_fallthru
          _
        %s550 = sand.u32 %s34, 1
        %s551 = scalar_lea.sflag [#allocation18], %s550
        %s552 = sand.u32 %s240, 1
        %s553 = scalar_lea.vmem [#allocation17], %s552
        // Predicated region
        $region89: #{forward.1} parent=59 // pred_check
          %p554 = pneg %p253
        $region90: #{forward.1} parent=59 // pred_check_branch
          %556 = sbr.rel (%p554) target = $region92
        $region91: #{forward.1} parent=59 // pred_region
          %557 = dma.done %s551, 16
        $region92: #{forward.1} parent=59 // pred_fallthru
          _
        // Predicated region
        $region93: #{forward.1} parent=59 // pred_check
          %p558 = pneg %p274
        $region94: #{forward.1} parent=59 // pred_check_branch
          %560 = sbr.rel (%p558) target = $region96
        $region95: #{forward.1} parent=59 // pred_region
          %561 = dma.done [#allocation18], 3072
        $region96: #{forward.1} parent=59 // pred_fallthru
          _
        // Predicated region
        $region97: #{forward.1} parent=59 // pred_check
          %p562 = pneg %p295
        $region98: #{forward.1} parent=59 // pred_check_branch
          %564 = sbr.rel (%p562) target = $region100
        $region99: #{forward.1} parent=59 // pred_region
          %565 = dma.done [#allocation21], 16
        $region100: #{forward.1} parent=59 // pred_fallthru
          _
        %p566 = pneg %p69
        %p567 = pneg %p66
        %p568 = pneg %p95
        %p569 = pneg %p92
        %p570 = pneg %p123
        %p571 = pneg %p120
        %s572 = sand.u32 %s34, 1
        %s573 = scalar_lea.sflag [#allocation12], %s572
        %s574 = sand.u32 %s136, 1
        %s575 = smul.addr %s574, 64
        %s576 = scalar_lea.vmem [#allocation11], %s575
        %p577 = pneg %p149
        %p578 = pneg %p146
        %s579 = sand.u32 %s34, 1
        %s580 = scalar_lea.sflag [#allocation12], %s579
        %s581 = sand.u32 %s162, 1
        %s582 = scalar_lea.vmem [#allocation13], %s581
        %p583 = pneg %p175
        %p584 = pneg %p172
        %s585 = sand.u32 %s34, 1
        %s586 = scalar_lea.sflag [#allocation15], %s585
        %s587 = sand.u32 %s188, 1
        %s588 = smul.addr %s587, 64
        %s589 = scalar_lea.vmem [#allocation14], %s588
        %p590 = pneg %p201
        %p591 = pneg %p198
        %s592 = sand.u32 %s34, 1
        %s593 = scalar_lea.sflag [#allocation15], %s592
        %s594 = sand.u32 %s214, 1
        %s595 = scalar_lea.vmem [#allocation16], %s594
        %p596 = pneg %p227
        %p597 = pneg %p224
        %s598 = sand.u32 %s34, 1
        %s599 = scalar_lea.sflag [#allocation18], %s598
        %s600 = sand.u32 %s240, 1
        %s601 = scalar_lea.vmem [#allocation17], %s600
        %p602 = pneg %p253
        %p603 = pneg %p250
        %p604 = pneg %p274
        %p605 = pneg %p271
        %p606 = pneg %p295
        %p607 = pneg %p292
        %p608 = pneg %p316
        %p609 = pneg %p313
        %s610 = smul.u32 16, %s40
        %p612 = scmp.lt.s32.totalorder %s39, 0
        %s613 = ssub.s32 0, %s39
        %s614 = scalar_select %p612, %s613, %s39
        %s615 = sand.u32 %s614, 1
        %s616 = ssub.s32 0, %s615
        %s617 = scalar_select %p612, %s616, %s615
        %p618 = scmp.ne.s32.totalorder %s617, 0
        %p619 = scmp.lt.s32.totalorder %s617, 0
        %p620 = pnand %p619, %p618
        %p621 = pneg %p620
        %s622 = sadd.s32 %s617, 2
        %s623 = scalar_select %p621, %s622, %s617
        %s624 = sadd.s32 %s39, 1
        %p625 = scmp.lt.s32.totalorder %s624, 0
        %s626 = ssub.s32 0, %s624
        %s627 = scalar_select %p625, %s626, %s624
        %s628 = sand.u32 %s627, 1
        %s629 = ssub.s32 0, %s628
        %s630 = scalar_select %p625, %s629, %s628
        %p631 = scmp.ne.s32.totalorder %s630, 0
        %p632 = scmp.lt.s32.totalorder %s630, 0
        %p633 = pnand %p632, %p631
        %p634 = pneg %p633
        %s635 = sadd.s32 %s630, 2
        %s636 = scalar_select %p634, %s635, %s630
        %s637 = smul.u32 %s40, 128
        %s638 = smul.u32 %s41, 128
        %p639 = scmp.eq.s32.totalorder %s39, 0
        %p640 = scmp.eq.s32.totalorder %s40, 0
        %p641 = pnand %p639, %p640
        %p642 = pneg %p641
        %p643 = scmp.eq.s32.totalorder %s41, 0
        %p644 = pnand %p642, %p643
        %p645 = pneg %p644
        // Predicated region
        $region101: #{forward.1} parent=59 // pred_check
          _
        $region102: #{forward.1} parent=59 // pred_check_branch
          %647 = sbr.rel (%p644) target = $region104
        $region103: #{forward.1} parent=59 // pred_region
          %v648 = vld [vmem:[#allocation5] sm:$0xf]
          %v649 = vld [vmem:[#allocation5 + $0x4] sm:$0xf]
          %v650 = vld [vmem:[#allocation5 + $0x8] sm:$0xf]
          %v651 = vld [vmem:[#allocation5 + $0xc] sm:$0xf]
          %v652 = vld [vmem:[#allocation5 + $0x10] sm:$0xf]
          %v653 = vld [vmem:[#allocation5 + $0x14] sm:$0xf]
          %v654 = vld [vmem:[#allocation5 + $0x18] sm:$0xf]
          %v655 = vld [vmem:[#allocation5 + $0x1c] sm:$0xf]
          %v656 = vld [vmem:[#allocation5 + $0x20] sm:$0xf]
          %v657 = vld [vmem:[#allocation5 + $0x24] sm:$0xf]
          %v658 = vld [vmem:[#allocation5 + $0x28] sm:$0xf]
          %v659 = vld [vmem:[#allocation5 + $0x2c] sm:$0xf]
          %v660 = vld [vmem:[#allocation5 + $0x30] sm:$0xf]
          %v661 = vld [vmem:[#allocation5 + $0x34] sm:$0xf]
          %v662 = vld [vmem:[#allocation5 + $0x38] sm:$0xf]
          %v663 = vld [vmem:[#allocation5 + $0x3c] sm:$0xf]
          %v680 = vunpack.c.l.b16 %v648
          %v681 = vunpack.c.l.b16 %v649
          %v682 = vunpack.c.l.b16 %v650
          %v683 = vunpack.c.l.b16 %v651
          %v684 = vunpack.c.l.b16 %v652
          %v685 = vunpack.c.l.b16 %v653
          %v686 = vunpack.c.l.b16 %v654
          %v687 = vunpack.c.l.b16 %v655
          %v688 = vunpack.c.l.b16 %v656
          %v689 = vunpack.c.l.b16 %v657
          %v690 = vunpack.c.l.b16 %v658
          %v691 = vunpack.c.l.b16 %v659
          %v692 = vunpack.c.l.b16 %v660
          %v693 = vunpack.c.l.b16 %v661
          %v694 = vunpack.c.l.b16 %v662
          %v695 = vunpack.c.l.b16 %v663
          %v696 = vpack.c.b16 %v681, %v680
          %v697 = vpack.c.b16 %v683, %v682
          %v698 = vpack.c.b16 %v685, %v684
          %v699 = vpack.c.b16 %v687, %v686
          %v700 = vpack.c.b16 %v689, %v688
          %v701 = vpack.c.b16 %v691, %v690
          %v702 = vpack.c.b16 %v693, %v692
          %v703 = vpack.c.b16 %v695, %v694
          %712 = vst [vmem:[#allocation2] sm:$0xff] %v696
          %713 = vst [vmem:[#allocation2 + $0x8] sm:$0xff] %v697
          %714 = vst [vmem:[#allocation2 + $0x10] sm:$0xff] %v698
          %715 = vst [vmem:[#allocation2 + $0x18] sm:$0xff] %v699
          %716 = vst [vmem:[#allocation2 + $0x20] sm:$0xff] %v700
          %717 = vst [vmem:[#allocation2 + $0x28] sm:$0xff] %v701
          %718 = vst [vmem:[#allocation2 + $0x30] sm:$0xff] %v702
          %719 = vst [vmem:[#allocation2 + $0x38] sm:$0xff] %v703
          %720 = vst [vmem:[#allocation4] sm:$0xff] 0.0
          %721 = vst [vmem:[#allocation4 + $0x8] sm:$0xff] 0.0
          %722 = vst [vmem:[#allocation4 + $0x10] sm:$0xff] 0.0
          %723 = vst [vmem:[#allocation4 + $0x18] sm:$0xff] 0.0
          %724 = vst [vmem:[#allocation4 + $0x20] sm:$0xff] 0.0
          %725 = vst [vmem:[#allocation4 + $0x28] sm:$0xff] 0.0
        $region104: #{forward.1} parent=59 // pred_fallthru
          _
        %p726 = pnand %p639, %p643
        %p727 = pneg %p726
        // Predicated region
        $region105: #{forward.1} parent=59 // pred_check
          _
        $region106: #{forward.1} parent=59 // pred_check_branch
          %729 = sbr.rel (%p726) target = $region108
        $region107: #{forward.1} parent=59 // pred_region
          %s730 = sshra.s32 %s637, 3
          %s731 = sand.u32 %s637, 7
          %s732 = smul.addr %s730, 4
          %s733 = scalar_lea.vmem [#allocation5], %s732
          %v734 = vld [vmem:[%s733] sm:$0xf]
          %v735 = vld [vmem:[%s733 + $0x4] sm:$0xf]
          %v736 = vld [vmem:[%s733 + $0x8] sm:$0xf]
          %v737 = vld [vmem:[%s733 + $0xc] sm:$0xf]
          %v738 = vld [vmem:[%s733 + $0x10] sm:$0xf]
          %v739 = vld [vmem:[%s733 + $0x14] sm:$0xf]
          %v740 = vld [vmem:[%s733 + $0x18] sm:$0xf]
          %v741 = vld [vmem:[%s733 + $0x1c] sm:$0xf]
          %v742 = vld [vmem:[%s733 + $0x20] sm:$0xf]
          %v743 = vld [vmem:[%s733 + $0x24] sm:$0xf]
          %v744 = vld [vmem:[%s733 + $0x28] sm:$0xf]
          %v745 = vld [vmem:[%s733 + $0x2c] sm:$0xf]
          %v746 = vld [vmem:[%s733 + $0x30] sm:$0xf]
          %v747 = vld [vmem:[%s733 + $0x34] sm:$0xf]
          %v748 = vld [vmem:[%s733 + $0x38] sm:$0xf]
          %v749 = vld [vmem:[%s733 + $0x3c] sm:$0xf]
          %v750 = vld [vmem:[#allocation4] sm:$0xff]
          %v751 = vld [vmem:[#allocation4 + $0x8] sm:$0xff]
          %v752 = vld [vmem:[#allocation8] sm:$0xf]
          %v753 = vld [vmem:[#allocation8 + $0x4] sm:$0xf]
          %v756 = vunpack.c.l.b16 %v752
          %v757 = vunpack.c.l.b16 %v753
          %v758 = vpack.c.b16 %v757, %v756
          %v776 = vunpack.c.l.b16 %v734
          %v777 = vunpack.c.l.b16 %v735
          %v778 = vunpack.c.l.b16 %v736
          %v779 = vunpack.c.l.b16 %v737
          %v780 = vunpack.c.l.b16 %v738
          %v781 = vunpack.c.l.b16 %v739
          %v782 = vunpack.c.l.b16 %v740
          %v783 = vunpack.c.l.b16 %v741
          %v784 = vunpack.c.l.b16 %v742
          %v785 = vunpack.c.l.b16 %v743
          %v786 = vunpack.c.l.b16 %v744
          %v787 = vunpack.c.l.b16 %v745
          %v788 = vunpack.c.l.b16 %v746
          %v789 = vunpack.c.l.b16 %v747
          %v790 = vunpack.c.l.b16 %v748
          %v791 = vunpack.c.l.b16 %v749
          %v792 = vpack.c.b16 %v777, %v776
          %v793 = vpack.c.b16 %v779, %v778
          %v794 = vpack.c.b16 %v781, %v780
          %v795 = vpack.c.b16 %v783, %v782
          %v796 = vpack.c.b16 %v785, %v784
          %v797 = vpack.c.b16 %v787, %v786
          %v798 = vpack.c.b16 %v789, %v788
          %v799 = vpack.c.b16 %v791, %v790
          %808 = vmatprep.subr.bf16.mxu0 0
          %809 = vmatpush1.bf16.msra.mxu0 %v792
          %810 = vmatprep.subr.bf16.mxu0 0
          %811 = vmatpush1.bf16.msra.mxu0 %v793
          %812 = vmatprep.subr.bf16.mxu0 0
          %813 = vmatpush1.bf16.msra.mxu0 %v794
          %814 = vmatprep.subr.bf16.mxu0 0
          %815 = vmatpush1.bf16.msra.mxu0 %v795
          %816 = vmatprep.subr.bf16.mxu0 0
          %817 = vmatpush1.bf16.msra.mxu0 %v796
          %818 = vmatprep.subr.bf16.mxu0 0
          %819 = vmatpush1.bf16.msra.mxu0 %v797
          %820 = vmatprep.subr.bf16.mxu0 0
          %821 = vmatpush1.bf16.msra.mxu0 %v798
          %822 = vmatprep.subr.bf16.mxu0 0
          %823 = vmatpush1.bf16.msra.mxu0 %v799
          %824 = vmatprep.subr.bf16.mxu0 0
          %825 = vmatpush1.bf16.msra.mxu0 0
          %826 = vmatprep.subr.bf16.mxu0 0
          %827 = vmatpush1.bf16.msra.mxu0 0
          %828 = vmatprep.subr.bf16.mxu0 0
          %829 = vmatpush1.bf16.msra.mxu0 0
          %830 = vmatprep.subr.bf16.mxu0 0
          %831 = vmatpush1.bf16.msra.mxu0 0
          %832 = vmatprep.subr.bf16.mxu0 0
          %833 = vmatpush1.bf16.msra.mxu0 0
          %834 = vmatprep.subr.bf16.mxu0 0
          %835 = vmatpush1.bf16.msra.mxu0 0
          %836 = vmatprep.subr.bf16.mxu0 0
          %837 = vmatpush1.bf16.msra.mxu0 0
          %838 = vmatprep.subr.bf16.mxu0 0
          %839 = vmatpush1.bf16.msra.mxu0 0
          %840 = vmatprep.mubr.bf16.mxu0 0
          %841 = vmatmul.mubr.bf16.gmra.mrb[0].mxu0 %v758
          %v842 = vpop.f32.mrb[0].mxu0
          %v843 = vadd.f32 0.0, %v842
          %v844 = vpop.f32.mrb[0].mxu0
          %v845 = vpop.f32.mrb[0].mxu0
          %v846 = vadd.f32 0.0, %v845
          %v847 = vpop.f32.mrb[0].mxu0
          %848 = vdwg.mxu0
          %v849 = vadd.f32 %v750, %v843
          %v850 = vadd.f32 %v751, %v846
          %851 = vst [vmem:[#allocation4] sm:$0xff] %v849
          %852 = vst [vmem:[#allocation4 + $0x8] sm:$0xff] %v850
        $region108: #{forward.1} parent=59 // pred_fallthru
          _
        // Predicated region
        $region109: #{forward.1} parent=59 // pred_check
          %p853 = pneg %p643
        $region110: #{forward.1} parent=59 // pred_check_branch
          %855 = sbr.rel (%p853) target = $region112
        $region111: #{forward.1} parent=59 // pred_region
          %s856 = sshra.s32 %s637, 4
          %s857 = sand.u32 %s637, 15
          %s858 = smul.u32 %s623, 8
          %s859 = sadd.s32 %s856, %s858
          %s860 = smul.addr %s859, 8
          %s861 = scalar_lea.vmem [#allocation2], %s860
          %v862 = vld [vmem:[%s861] sm:$0xff]
          %v863 = vld [vmem:[%s861 + $0x8] sm:$0xff]
          %v864 = vld [vmem:[%s861 + $0x10] sm:$0xff]
          %v865 = vld [vmem:[%s861 + $0x18] sm:$0xff]
          %v866 = vld [vmem:[%s861 + $0x20] sm:$0xff]
          %v867 = vld [vmem:[%s861 + $0x28] sm:$0xff]
          %v868 = vld [vmem:[%s861 + $0x30] sm:$0xff]
          %v869 = vld [vmem:[%s861 + $0x38] sm:$0xff]
          %v870 = vunpack.c.l.bf16 %v862
          %v871 = vunpack.c.h.bf16 %v862
          %v872 = vunpack.c.l.bf16 %v863
          %v873 = vunpack.c.h.bf16 %v863
          %v874 = vunpack.c.l.bf16 %v864
          %v875 = vunpack.c.h.bf16 %v864
          %v876 = vunpack.c.l.bf16 %v865
          %v877 = vunpack.c.h.bf16 %v865
          %v878 = vunpack.c.l.bf16 %v866
          %v879 = vunpack.c.h.bf16 %v866
          %v880 = vunpack.c.l.bf16 %v867
          %v881 = vunpack.c.h.bf16 %v867
          %v882 = vunpack.c.l.bf16 %v868
          %v883 = vunpack.c.h.bf16 %v868
          %v884 = vunpack.c.l.bf16 %v869
          %v885 = vunpack.c.h.bf16 %v869
          %v886 = vld [vmem:[%s553] sm:$0x1]
          %v888 = vlaneseq
          %v889 = vshrl.u32 %v888, 7
          %v890 = vsub.s32 0, %v889
          %v891 = vrot.slane %v886, %v890
          %v893 = vmul.f32 %v891, %v870
          %v894 = vmul.f32 %v891, %v871
          %v895 = vmul.f32 %v891, %v872
          %v896 = vmul.f32 %v891, %v873
          %v897 = vmul.f32 %v891, %v874
          %v898 = vmul.f32 %v891, %v875
          %v899 = vmul.f32 %v891, %v876
          %v900 = vmul.f32 %v891, %v877
          %v901 = vmul.f32 %v891, %v878
          %v902 = vmul.f32 %v891, %v879
          %v903 = vmul.f32 %v891, %v880
          %v904 = vmul.f32 %v891, %v881
          %v905 = vmul.f32 %v891, %v882
          %v906 = vmul.f32 %v891, %v883
          %v907 = vmul.f32 %v891, %v884
          %v908 = vmul.f32 %v891, %v885
          %909 = vst [vmem:[#allocation3] sm:$0xff] %v893
          %910 = vst [vmem:[#allocation3 + $0x8] sm:$0xff] %v894
          %911 = vst [vmem:[#allocation3 + $0x10] sm:$0xff] %v895
          %912 = vst [vmem:[#allocation3 + $0x18] sm:$0xff] %v896
          %913 = vst [vmem:[#allocation3 + $0x20] sm:$0xff] %v897
          %914 = vst [vmem:[#allocation3 + $0x28] sm:$0xff] %v898
          %915 = vst [vmem:[#allocation3 + $0x30] sm:$0xff] %v899
          %916 = vst [vmem:[#allocation3 + $0x38] sm:$0xff] %v900
          %917 = vst [vmem:[#allocation3 + $0x40] sm:$0xff] %v901
          %918 = vst [vmem:[#allocation3 + $0x48] sm:$0xff] %v902
          %919 = vst [vmem:[#allocation3 + $0x50] sm:$0xff] %v903
          %920 = vst [vmem:[#allocation3 + $0x58] sm:$0xff] %v904
          %921 = vst [vmem:[#allocation3 + $0x60] sm:$0xff] %v905
          %922 = vst [vmem:[#allocation3 + $0x68] sm:$0xff] %v906
          %923 = vst [vmem:[#allocation3 + $0x70] sm:$0xff] %v907
          %924 = vst [vmem:[#allocation3 + $0x78] sm:$0xff] %v908
        $region112: #{forward.1} parent=59 // pred_fallthru
          _
        %s925 = sshra.s32 %s638, 4
        %s926 = sand.u32 %s638, 15
        %s927 = smul.u32 %s623, 8
        %s928 = sadd.s32 %s925, %s927
        %s929 = smul.addr %s928, 8
        %s930 = scalar_lea.vmem [#allocation2], %s929
        %v931 = vld [vmem:[%s930] sm:$0xff]
        %v932 = vld [vmem:[%s930 + $0x8] sm:$0xff]
        %v933 = vld [vmem:[%s930 + $0x10] sm:$0xff]
        %v934 = vld [vmem:[%s930 + $0x18] sm:$0xff]
        %v935 = vld [vmem:[%s930 + $0x20] sm:$0xff]
        %v936 = vld [vmem:[%s930 + $0x28] sm:$0xff]
        %v937 = vld [vmem:[%s930 + $0x30] sm:$0xff]
        %v938 = vld [vmem:[%s930 + $0x38] sm:$0xff]
        %v939 = vld [vmem:[#allocation3] sm:$0xff]
        %v940 = vld [vmem:[#allocation3 + $0x8] sm:$0xff]
        %v941 = vld [vmem:[#allocation3 + $0x10] sm:$0xff]
        %v942 = vld [vmem:[#allocation3 + $0x18] sm:$0xff]
        %v943 = vld [vmem:[#allocation3 + $0x20] sm:$0xff]
        %v944 = vld [vmem:[#allocation3 + $0x28] sm:$0xff]
        %v945 = vld [vmem:[#allocation3 + $0x30] sm:$0xff]
        %v946 = vld [vmem:[#allocation3 + $0x38] sm:$0xff]
        %v947 = vld [vmem:[#allocation3 + $0x40] sm:$0xff]
        %v948 = vld [vmem:[#allocation3 + $0x48] sm:$0xff]
        %v949 = vld [vmem:[#allocation3 + $0x50] sm:$0xff]
        %v950 = vld [vmem:[#allocation3 + $0x58] sm:$0xff]
        %v951 = vld [vmem:[#allocation3 + $0x60] sm:$0xff]
        %v952 = vld [vmem:[#allocation3 + $0x68] sm:$0xff]
        %v953 = vld [vmem:[#allocation3 + $0x70] sm:$0xff]
        %v954 = vld [vmem:[#allocation3 + $0x78] sm:$0xff]
        %v955 = vld [vmem:[#allocation10] sm:$0xf]
        %v956 = vld [vmem:[#allocation10 + $0x4] sm:$0xf]
        %v957 = vld [vmem:[#allocation10 + $0x8] sm:$0xf]
        %v958 = vld [vmem:[#allocation10 + $0xc] sm:$0xf]
        %v959 = vld [vmem:[#allocation10 + $0x10] sm:$0xf]
        %v960 = vld [vmem:[#allocation10 + $0x14] sm:$0xf]
        %v961 = vld [vmem:[#allocation10 + $0x18] sm:$0xf]
        %v962 = vld [vmem:[#allocation10 + $0x1c] sm:$0xf]
        %v963 = vld [vmem:[#allocation10 + $0x20] sm:$0xf]
        %v964 = vld [vmem:[#allocation10 + $0x24] sm:$0xf]
        %v965 = vld [vmem:[#allocation10 + $0x28] sm:$0xf]
        %v966 = vld [vmem:[#allocation10 + $0x2c] sm:$0xf]
        %v967 = vld [vmem:[#allocation10 + $0x30] sm:$0xf]
        %v968 = vld [vmem:[#allocation10 + $0x34] sm:$0xf]
        %v969 = vld [vmem:[#allocation10 + $0x38] sm:$0xf]
        %v970 = vld [vmem:[#allocation10 + $0x3c] sm:$0xf]
        %v987 = vunpack.c.l.b16 %v955
        %v988 = vunpack.c.l.b16 %v956
        %v989 = vunpack.c.l.b16 %v957
        %v990 = vunpack.c.l.b16 %v958
        %v991 = vunpack.c.l.b16 %v959
        %v992 = vunpack.c.l.b16 %v960
        %v993 = vunpack.c.l.b16 %v961
        %v994 = vunpack.c.l.b16 %v962
        %v995 = vunpack.c.l.b16 %v963
        %v996 = vunpack.c.l.b16 %v964
        %v997 = vunpack.c.l.b16 %v965
        %v998 = vunpack.c.l.b16 %v966
        %v999 = vunpack.c.l.b16 %v967
        %v1000 = vunpack.c.l.b16 %v968
        %v1001 = vunpack.c.l.b16 %v969
        %v1002 = vunpack.c.l.b16 %v970
        %v1003 = vpack.c.b16 %v988, %v987
        %v1004 = vpack.c.b16 %v990, %v989
        %v1005 = vpack.c.b16 %v992, %v991
        %v1006 = vpack.c.b16 %v994, %v993
        %v1007 = vpack.c.b16 %v996, %v995
        %v1008 = vpack.c.b16 %v998, %v997
        %v1009 = vpack.c.b16 %v1000, %v999
        %v1010 = vpack.c.b16 %v1002, %v1001
        %1019 = vmatprep.subr.bf16.mxu0 0
        %1020 = vmatpush1.bf16.msra.mxu0 %v931
        %1021 = vmatprep.subr.bf16.mxu0 0
        %1022 = vmatpush1.bf16.msra.mxu0 %v932
        %1023 = vmatprep.subr.bf16.mxu0 0
        %1024 = vmatpush1.bf16.msra.mxu0 %v933
        %1025 = vmatprep.subr.bf16.mxu0 0
        %1026 = vmatpush1.bf16.msra.mxu0 %v934
        %1027 = vmatprep.subr.bf16.mxu0 0
        %1028 = vmatpush1.bf16.msra.mxu0 %v935
        %1029 = vmatprep.subr.bf16.mxu0 0
        %1030 = vmatpush1.bf16.msra.mxu0 %v936
        %1031 = vmatprep.subr.bf16.mxu0 0
        %1032 = vmatpush1.bf16.msra.mxu0 %v937
        %1033 = vmatprep.subr.bf16.mxu0 0
        %1034 = vmatpush1.bf16.msra.mxu0 %v938
        %1035 = vmatprep.subr.bf16.mxu0 0
        %1036 = vmatpush1.bf16.msra.mxu0 0
        %1037 = vmatprep.subr.bf16.mxu0 0
        %1038 = vmatpush1.bf16.msra.mxu0 0
        %1039 = vmatprep.subr.bf16.mxu0 0
        %1040 = vmatpush1.bf16.msra.mxu0 0
        %1041 = vmatprep.subr.bf16.mxu0 0
        %1042 = vmatpush1.bf16.msra.mxu0 0
        %1043 = vmatprep.subr.bf16.mxu0 0
        %1044 = vmatpush1.bf16.msra.mxu0 0
        %1045 = vmatprep.subr.bf16.mxu0 0
        %1046 = vmatpush1.bf16.msra.mxu0 0
        %1047 = vmatprep.subr.bf16.mxu0 0
        %1048 = vmatpush1.bf16.msra.mxu0 0
        %1049 = vmatprep.subr.bf16.mxu0 0
        %1050 = vmatpush1.bf16.msra.mxu0 0
        %1051 = vmatprep.mubr.bf16.mxu0 0
        %1052 = vmatmul.mubr.bf16.gmra.mrb[0].mxu0 %v1003
        %v1053 = vpop.f32.mrb[0].mxu0
        %v1054 = vadd.f32 0.0, %v1053
        %v1055 = vpop.f32.mrb[0].mxu0
        %v1056 = vpop.f32.mrb[0].mxu0
        %v1057 = vadd.f32 0.0, %v1056
        %v1058 = vpop.f32.mrb[0].mxu0
        %1059 = vmatprep.mubr.bf16.mxu0 0
        %1060 = vmatmul.mubr.bf16.gmra.mrb[0].mxu0 %v1004
        %v1061 = vpop.f32.mrb[0].mxu0
        %v1062 = vadd.f32 0.0, %v1061
        %v1063 = vpop.f32.mrb[0].mxu0
        %v1064 = vpop.f32.mrb[0].mxu0
        %v1065 = vadd.f32 0.0, %v1064
        %v1066 = vpop.f32.mrb[0].mxu0
        %1067 = vmatprep.mubr.bf16.mxu0 0
        %1068 = vmatmul.mubr.bf16.gmra.mrb[0].mxu0 %v1005
        %v1069 = vpop.f32.mrb[0].mxu0
        %v1070 = vadd.f32 0.0, %v1069
        %v1071 = vpop.f32.mrb[0].mxu0
        %v1072 = vpop.f32.mrb[0].mxu0
        %v1073 = vadd.f32 0.0, %v1072
        %v1074 = vpop.f32.mrb[0].mxu0
        %1075 = vmatprep.mubr.bf16.mxu0 0
        %1076 = vmatmul.mubr.bf16.gmra.mrb[0].mxu0 %v1006
        %v1077 = vpop.f32.mrb[0].mxu0
        %v1078 = vadd.f32 0.0, %v1077
        %v1079 = vpop.f32.mrb[0].mxu0
        %v1080 = vpop.f32.mrb[0].mxu0
        %v1081 = vadd.f32 0.0, %v1080
        %v1082 = vpop.f32.mrb[0].mxu0
        %1083 = vmatprep.mubr.bf16.mxu0 0
        %1084 = vmatmul.mubr.bf16.gmra.mrb[0].mxu0 %v1007
        %v1085 = vpop.f32.mrb[0].mxu0
        %v1086 = vadd.f32 0.0, %v1085
        %v1087 = vpop.f32.mrb[0].mxu0
        %v1088 = vpop.f32.mrb[0].mxu0
        %v1089 = vadd.f32 0.0, %v1088
        %v1090 = vpop.f32.mrb[0].mxu0
        %1091 = vmatprep.mubr.bf16.mxu0 0
        %1092 = vmatmul.mubr.bf16.gmra.mrb[0].mxu0 %v1008
        %v1093 = vpop.f32.mrb[0].mxu0
        %v1094 = vadd.f32 0.0, %v1093
        %v1095 = vpop.f32.mrb[0].mxu0
        %v1096 = vpop.f32.mrb[0].mxu0
        %v1097 = vadd.f32 0.0, %v1096
        %v1098 = vpop.f32.mrb[0].mxu0
        %1099 = vmatprep.mubr.bf16.mxu0 0
        %1100 = vmatmul.mubr.bf16.gmra.mrb[0].mxu0 %v1009
        %v1101 = vpop.f32.mrb[0].mxu0
        %v1102 = vadd.f32 0.0, %v1101
        %v1103 = vpop.f32.mrb[0].mxu0
        %v1104 = vpop.f32.mrb[0].mxu0
        %v1105 = vadd.f32 0.0, %v1104
        %v1106 = vpop.f32.mrb[0].mxu0
        %1107 = vmatprep.mubr.bf16.mxu0 0
        %1108 = vmatmul.mubr.bf16.gmra.mrb[0].mxu0 %v1010
        %v1109 = vpop.f32.mrb[0].mxu0
        %v1110 = vadd.f32 0.0, %v1109
        %v1111 = vpop.f32.mrb[0].mxu0
        %v1112 = vpop.f32.mrb[0].mxu0
        %v1113 = vadd.f32 0.0, %v1112
        %v1114 = vpop.f32.mrb[0].mxu0
        %1115 = vdwg.mxu0
        %v1116 = vadd.f32 %v939, %v1054
        %v1117 = vadd.f32 %v940, %v1057
        %v1118 = vadd.f32 %v941, %v1062
        %v1119 = vadd.f32 %v942, %v1065
        %v1120 = vadd.f32 %v943, %v1070
        %v1121 = vadd.f32 %v944, %v1073
        %v1122 = vadd.f32 %v945, %v1078
        %v1123 = vadd.f32 %v946, %v1081
        %v1124 = vadd.f32 %v947, %v1086
        %v1125 = vadd.f32 %v948, %v1089
        %v1126 = vadd.f32 %v949, %v1094
        %v1127 = vadd.f32 %v950, %v1097
        %v1128 = vadd.f32 %v951, %v1102
        %v1129 = vadd.f32 %v952, %v1105
        %v1130 = vadd.f32 %v953, %v1110
        %v1131 = vadd.f32 %v954, %v1113
        %1132 = vst [vmem:[#allocation3] sm:$0xff] %v1116
        %1133 = vst [vmem:[#allocation3 + $0x8] sm:$0xff] %v1117
        %1134 = vst [vmem:[#allocation3 + $0x10] sm:$0xff] %v1118
        %1135 = vst [vmem:[#allocation3 + $0x18] sm:$0xff] %v1119
        %1136 = vst [vmem:[#allocation3 + $0x20] sm:$0xff] %v1120
        %1137 = vst [vmem:[#allocation3 + $0x28] sm:$0xff] %v1121
        %1138 = vst [vmem:[#allocation3 + $0x30] sm:$0xff] %v1122
        %1139 = vst [vmem:[#allocation3 + $0x38] sm:$0xff] %v1123
        %1140 = vst [vmem:[#allocation3 + $0x40] sm:$0xff] %v1124
        %1141 = vst [vmem:[#allocation3 + $0x48] sm:$0xff] %v1125
        %1142 = vst [vmem:[#allocation3 + $0x50] sm:$0xff] %v1126
        %1143 = vst [vmem:[#allocation3 + $0x58] sm:$0xff] %v1127
        %1144 = vst [vmem:[#allocation3 + $0x60] sm:$0xff] %v1128
        %1145 = vst [vmem:[#allocation3 + $0x68] sm:$0xff] %v1129
        %1146 = vst [vmem:[#allocation3 + $0x70] sm:$0xff] %v1130
        %1147 = vst [vmem:[#allocation3 + $0x78] sm:$0xff] %v1131
        // Predicated region
        $region113: #{forward.1} parent=59 // pred_check
          %p1148 = pneg %p643
        $region114: #{forward.1} parent=59 // pred_check_branch
          %1150 = sbr.rel (%p1148) target = $region116
        $region115: #{forward.1} parent=59 // pred_region
          %v1151 = vld [vmem:[#allocation3] sm:$0xff]
          %v1152 = vld [vmem:[#allocation3 + $0x8] sm:$0xff]
          %v1153 = vld [vmem:[#allocation3 + $0x10] sm:$0xff]
          %v1154 = vld [vmem:[#allocation3 + $0x18] sm:$0xff]
          %v1155 = vld [vmem:[#allocation3 + $0x20] sm:$0xff]
          %v1156 = vld [vmem:[#allocation3 + $0x28] sm:$0xff]
          %v1157 = vld [vmem:[#allocation3 + $0x30] sm:$0xff]
          %v1158 = vld [vmem:[#allocation3 + $0x38] sm:$0xff]
          %v1159 = vld [vmem:[#allocation3 + $0x40] sm:$0xff]
          %v1160 = vld [vmem:[#allocation3 + $0x48] sm:$0xff]
          %v1161 = vld [vmem:[#allocation3 + $0x50] sm:$0xff]
          %v1162 = vld [vmem:[#allocation3 + $0x58] sm:$0xff]
          %v1163 = vld [vmem:[#allocation3 + $0x60] sm:$0xff]
          %v1164 = vld [vmem:[#allocation3 + $0x68] sm:$0xff]
          %v1165 = vld [vmem:[#allocation3 + $0x70] sm:$0xff]
          %v1166 = vld [vmem:[#allocation3 + $0x78] sm:$0xff]
          %v1167 = vpack.c.bf16 %v1152, %v1151
          %v1168 = vpack.c.bf16 %v1154, %v1153
          %v1169 = vpack.c.bf16 %v1156, %v1155
          %v1170 = vpack.c.bf16 %v1158, %v1157
          %v1171 = vpack.c.bf16 %v1160, %v1159
          %v1172 = vpack.c.bf16 %v1162, %v1161
          %v1173 = vpack.c.bf16 %v1164, %v1163
          %v1174 = vpack.c.bf16 %v1166, %v1165
          %v1175 = vld [vmem:[%s520] sm:$0xf]
          %v1176 = vld [vmem:[%s520 + $0x4] sm:$0xf]
          %v1177 = vld [vmem:[%s520 + $0x8] sm:$0xf]
          %v1178 = vld [vmem:[%s520 + $0xc] sm:$0xf]
          %v1179 = vld [vmem:[%s520 + $0x10] sm:$0xf]
          %v1180 = vld [vmem:[%s520 + $0x14] sm:$0xf]
          %v1181 = vld [vmem:[%s520 + $0x18] sm:$0xf]
          %v1182 = vld [vmem:[%s520 + $0x1c] sm:$0xf]
          %v1183 = vld [vmem:[%s520 + $0x20] sm:$0xf]
          %v1184 = vld [vmem:[%s520 + $0x24] sm:$0xf]
          %v1185 = vld [vmem:[%s520 + $0x28] sm:$0xf]
          %v1186 = vld [vmem:[%s520 + $0x2c] sm:$0xf]
          %v1187 = vld [vmem:[%s520 + $0x30] sm:$0xf]
          %v1188 = vld [vmem:[%s520 + $0x34] sm:$0xf]
          %v1189 = vld [vmem:[%s520 + $0x38] sm:$0xf]
          %v1190 = vld [vmem:[%s520 + $0x3c] sm:$0xf]
          %v1191 = vld [vmem:[%s528] sm:$0x1]
          %v1193 = vlaneseq
          %v1194 = vshrl.u32 %v1193, 7
          %v1195 = vsub.s32 0, %v1194
          %v1196 = vrot.slane %v1191, %v1195
          %v1214 = vunpack.c.l.b16 %v1175
          %v1215 = vunpack.c.l.b16 %v1176
          %v1216 = vunpack.c.l.b16 %v1177
          %v1217 = vunpack.c.l.b16 %v1178
          %v1218 = vunpack.c.l.b16 %v1179
          %v1219 = vunpack.c.l.b16 %v1180
          %v1220 = vunpack.c.l.b16 %v1181
          %v1221 = vunpack.c.l.b16 %v1182
          %v1222 = vunpack.c.l.b16 %v1183
          %v1223 = vunpack.c.l.b16 %v1184
          %v1224 = vunpack.c.l.b16 %v1185
          %v1225 = vunpack.c.l.b16 %v1186
          %v1226 = vunpack.c.l.b16 %v1187
          %v1227 = vunpack.c.l.b16 %v1188
          %v1228 = vunpack.c.l.b16 %v1189
          %v1229 = vunpack.c.l.b16 %v1190
          %v1230 = vpack.c.b16 %v1215, %v1214
          %v1231 = vpack.c.b16 %v1217, %v1216
          %v1232 = vpack.c.b16 %v1219, %v1218
          %v1233 = vpack.c.b16 %v1221, %v1220
          %v1234 = vpack.c.b16 %v1223, %v1222
          %v1235 = vpack.c.b16 %v1225, %v1224
          %v1236 = vpack.c.b16 %v1227, %v1226
          %v1237 = vpack.c.b16 %v1229, %v1228
          %1246 = vmatprep.subr.bf16.mxu0 0
          %1247 = vmatpush1.bf16.msra.mxu0 %v1230
          %1248 = vmatprep.subr.bf16.mxu0 0
          %1249 = vmatpush1.bf16.msra.mxu0 %v1231
          %1250 = vmatprep.subr.bf16.mxu0 0
          %1251 = vmatpush1.bf16.msra.mxu0 %v1232
          %1252 = vmatprep.subr.bf16.mxu0 0
          %1253 = vmatpush1.bf16.msra.mxu0 %v1233
          %1254 = vmatprep.subr.bf16.mxu0 0
          %1255 = vmatpush1.bf16.msra.mxu0 %v1234
          %1256 = vmatprep.subr.bf16.mxu0 0
          %1257 = vmatpush1.bf16.msra.mxu0 %v1235
          %1258 = vmatprep.subr.bf16.mxu0 0
          %1259 = vmatpush1.bf16.msra.mxu0 %v1236
          %1260 = vmatprep.subr.bf16.mxu0 0
          %1261 = vmatpush1.bf16.msra.mxu0 %v1237
          %1262 = vmatprep.subr.bf16.mxu0 0
          %1263 = vmatpush1.bf16.msra.mxu0 0
          %1264 = vmatprep.subr.bf16.mxu0 0
          %1265 = vmatpush1.bf16.msra.mxu0 0
          %1266 = vmatprep.subr.bf16.mxu0 0
          %1267 = vmatpush1.bf16.msra.mxu0 0
          %1268 = vmatprep.subr.bf16.mxu0 0
          %1269 = vmatpush1.bf16.msra.mxu0 0
          %1270 = vmatprep.subr.bf16.mxu0 0
          %1271 = vmatpush1.bf16.msra.mxu0 0
          %1272 = vmatprep.subr.bf16.mxu0 0
          %1273 = vmatpush1.bf16.msra.mxu0 0
          %1274 = vmatprep.subr.bf16.mxu0 0
          %1275 = vmatpush1.bf16.msra.mxu0 0
          %1276 = vmatprep.subr.bf16.mxu0 0
          %1277 = vmatpush1.bf16.msra.mxu0 0
          %1278 = vmatprep.mubr.bf16.mxu0 0
          %1279 = vmatmul.mubr.bf16.gmra.mrb[0].mxu0 %v1167
          %v1280 = vpop.f32.mrb[0].mxu0
          %v1281 = vadd.f32 %v1196, %v1280
          %v1282 = vpop.f32.mrb[0].mxu0
          %v1283 = vpop.f32.mrb[0].mxu0
          %v1284 = vadd.f32 %v1196, %v1283
          %v1285 = vpop.f32.mrb[0].mxu0
          %1286 = vmatprep.mubr.bf16.mxu0 0
          %1287 = vmatmul.mubr.bf16.gmra.mrb[0].mxu0 %v1168
          %v1288 = vpop.f32.mrb[0].mxu0
          %v1289 = vadd.f32 %v1196, %v1288
          %v1290 = vpop.f32.mrb[0].mxu0
          %v1291 = vpop.f32.mrb[0].mxu0
          %v1292 = vadd.f32 %v1196, %v1291
          %v1293 = vpop.f32.mrb[0].mxu0
          %1294 = vmatprep.mubr.bf16.mxu0 0
          %1295 = vmatmul.mubr.bf16.gmra.mrb[0].mxu0 %v1169
          %v1296 = vpop.f32.mrb[0].mxu0
          %v1297 = vadd.f32 %v1196, %v1296
          %v1298 = vpop.f32.mrb[0].mxu0
          %v1299 = vpop.f32.mrb[0].mxu0
          %v1300 = vadd.f32 %v1196, %v1299
          %v1301 = vpop.f32.mrb[0].mxu0
          %1302 = vmatprep.mubr.bf16.mxu0 0
          %1303 = vmatmul.mubr.bf16.gmra.mrb[0].mxu0 %v1170
          %v1304 = vpop.f32.mrb[0].mxu0
          %v1305 = vadd.f32 %v1196, %v1304
          %v1306 = vpop.f32.mrb[0].mxu0
          %v1307 = vpop.f32.mrb[0].mxu0
          %v1308 = vadd.f32 %v1196, %v1307
          %v1309 = vpop.f32.mrb[0].mxu0
          %1310 = vmatprep.mubr.bf16.mxu0 0
          %1311 = vmatmul.mubr.bf16.gmra.mrb[0].mxu0 %v1171
          %v1312 = vpop.f32.mrb[0].mxu0
          %v1313 = vadd.f32 %v1196, %v1312
          %v1314 = vpop.f32.mrb[0].mxu0
          %v1315 = vpop.f32.mrb[0].mxu0
          %v1316 = vadd.f32 %v1196, %v1315
          %v1317 = vpop.f32.mrb[0].mxu0
          %1318 = vmatprep.mubr.bf16.mxu0 0
          %1319 = vmatmul.mubr.bf16.gmra.mrb[0].mxu0 %v1172
          %v1320 = vpop.f32.mrb[0].mxu0
          %v1321 = vadd.f32 %v1196, %v1320
          %v1322 = vpop.f32.mrb[0].mxu0
          %v1323 = vpop.f32.mrb[0].mxu0
          %v1324 = vadd.f32 %v1196, %v1323
          %v1325 = vpop.f32.mrb[0].mxu0
          %1326 = vmatprep.mubr.bf16.mxu0 0
          %1327 = vmatmul.mubr.bf16.gmra.mrb[0].mxu0 %v1173
          %v1328 = vpop.f32.mrb[0].mxu0
          %v1329 = vadd.f32 %v1196, %v1328
          %v1330 = vpop.f32.mrb[0].mxu0
          %v1331 = vpop.f32.mrb[0].mxu0
          %v1332 = vadd.f32 %v1196, %v1331
          %v1333 = vpop.f32.mrb[0].mxu0
          %1334 = vmatprep.mubr.bf16.mxu0 0
          %1335 = vmatmul.mubr.bf16.gmra.mrb[0].mxu0 %v1174
          %v1336 = vpop.f32.mrb[0].mxu0
          %v1337 = vadd.f32 %v1196, %v1336
          %v1338 = vpop.f32.mrb[0].mxu0
          %v1339 = vpop.f32.mrb[0].mxu0
          %v1340 = vadd.f32 %v1196, %v1339
          %v1341 = vpop.f32.mrb[0].mxu0
          %1342 = vdwg.mxu0
          %v1343 = vmax.f32 %v1281, 0.0
          %v1344 = vmax.f32 %v1284, 0.0
          %v1345 = vmax.f32 %v1289, 0.0
          %v1346 = vmax.f32 %v1292, 0.0
          %v1347 = vmax.f32 %v1297, 0.0
          %v1348 = vmax.f32 %v1300, 0.0
          %v1349 = vmax.f32 %v1305, 0.0
          %v1350 = vmax.f32 %v1308, 0.0
          %v1351 = vmax.f32 %v1313, 0.0
          %v1352 = vmax.f32 %v1316, 0.0
          %v1353 = vmax.f32 %v1321, 0.0
          %v1354 = vmax.f32 %v1324, 0.0
          %v1355 = vmax.f32 %v1329, 0.0
          %v1356 = vmax.f32 %v1332, 0.0
          %v1357 = vmax.f32 %v1337, 0.0
          %v1358 = vmax.f32 %v1340, 0.0
          %v1359 = vpack.c.bf16 %v1344, %v1343
          %v1360 = vpack.c.bf16 %v1346, %v1345
          %v1361 = vpack.c.bf16 %v1348, %v1347
          %v1362 = vpack.c.bf16 %v1350, %v1349
          %v1363 = vpack.c.bf16 %v1352, %v1351
          %v1364 = vpack.c.bf16 %v1354, %v1353
          %v1365 = vpack.c.bf16 %v1356, %v1355
          %v1366 = vpack.c.bf16 %v1358, %v1357
          %v1367 = vld [vmem:[%s537] sm:$0xf]
          %v1368 = vld [vmem:[%s537 + $0x4] sm:$0xf]
          %v1369 = vld [vmem:[%s537 + $0x8] sm:$0xf]
          %v1370 = vld [vmem:[%s537 + $0xc] sm:$0xf]
          %v1371 = vld [vmem:[%s537 + $0x10] sm:$0xf]
          %v1372 = vld [vmem:[%s537 + $0x14] sm:$0xf]
          %v1373 = vld [vmem:[%s537 + $0x18] sm:$0xf]
          %v1374 = vld [vmem:[%s537 + $0x1c] sm:$0xf]
          %v1375 = vld [vmem:[%s537 + $0x20] sm:$0xf]
          %v1376 = vld [vmem:[%s537 + $0x24] sm:$0xf]
          %v1377 = vld [vmem:[%s537 + $0x28] sm:$0xf]
          %v1378 = vld [vmem:[%s537 + $0x2c] sm:$0xf]
          %v1379 = vld [vmem:[%s537 + $0x30] sm:$0xf]
          %v1380 = vld [vmem:[%s537 + $0x34] sm:$0xf]
          %v1381 = vld [vmem:[%s537 + $0x38] sm:$0xf]
          %v1382 = vld [vmem:[%s537 + $0x3c] sm:$0xf]
          %v1383 = vld [vmem:[%s545] sm:$0x1]
          %v1385 = vlaneseq
          %v1386 = vshrl.u32 %v1385, 7
          %v1387 = vsub.s32 0, %v1386
          %v1388 = vrot.slane %v1383, %v1387
          %v1406 = vunpack.c.l.b16 %v1367
          %v1407 = vunpack.c.l.b16 %v1368
          %v1408 = vunpack.c.l.b16 %v1369
          %v1409 = vunpack.c.l.b16 %v1370
          %v1410 = vunpack.c.l.b16 %v1371
          %v1411 = vunpack.c.l.b16 %v1372
          %v1412 = vunpack.c.l.b16 %v1373
          %v1413 = vunpack.c.l.b16 %v1374
          %v1414 = vunpack.c.l.b16 %v1375
          %v1415 = vunpack.c.l.b16 %v1376
          %v1416 = vunpack.c.l.b16 %v1377
          %v1417 = vunpack.c.l.b16 %v1378
          %v1418 = vunpack.c.l.b16 %v1379
          %v1419 = vunpack.c.l.b16 %v1380
          %v1420 = vunpack.c.l.b16 %v1381
          %v1421 = vunpack.c.l.b16 %v1382
          %v1422 = vpack.c.b16 %v1407, %v1406
          %v1423 = vpack.c.b16 %v1409, %v1408
          %v1424 = vpack.c.b16 %v1411, %v1410
          %v1425 = vpack.c.b16 %v1413, %v1412
          %v1426 = vpack.c.b16 %v1415, %v1414
          %v1427 = vpack.c.b16 %v1417, %v1416
          %v1428 = vpack.c.b16 %v1419, %v1418
          %v1429 = vpack.c.b16 %v1421, %v1420
          %1438 = vmatprep.subr.bf16.mxu0 0
          %1439 = vmatpush1.bf16.msra.mxu0 %v1422
          %1440 = vmatprep.subr.bf16.mxu0 0
          %1441 = vmatpush1.bf16.msra.mxu0 %v1423
          %1442 = vmatprep.subr.bf16.mxu0 0
          %1443 = vmatpush1.bf16.msra.mxu0 %v1424
          %1444 = vmatprep.subr.bf16.mxu0 0
          %1445 = vmatpush1.bf16.msra.mxu0 %v1425
          %1446 = vmatprep.subr.bf16.mxu0 0
          %1447 = vmatpush1.bf16.msra.mxu0 %v1426
          %1448 = vmatprep.subr.bf16.mxu0 0
          %1449 = vmatpush1.bf16.msra.mxu0 %v1427
          %1450 = vmatprep.subr.bf16.mxu0 0
          %1451 = vmatpush1.bf16.msra.mxu0 %v1428
          %1452 = vmatprep.subr.bf16.mxu0 0
          %1453 = vmatpush1.bf16.msra.mxu0 %v1429
          %1454 = vmatprep.subr.bf16.mxu0 0
          %1455 = vmatpush1.bf16.msra.mxu0 0
          %1456 = vmatprep.subr.bf16.mxu0 0
          %1457 = vmatpush1.bf16.msra.mxu0 0
          %1458 = vmatprep.subr.bf16.mxu0 0
          %1459 = vmatpush1.bf16.msra.mxu0 0
          %1460 = vmatprep.subr.bf16.mxu0 0
          %1461 = vmatpush1.bf16.msra.mxu0 0
          %1462 = vmatprep.subr.bf16.mxu0 0
          %1463 = vmatpush1.bf16.msra.mxu0 0
          %1464 = vmatprep.subr.bf16.mxu0 0
          %1465 = vmatpush1.bf16.msra.mxu0 0
          %1466 = vmatprep.subr.bf16.mxu0 0
          %1467 = vmatpush1.bf16.msra.mxu0 0
          %1468 = vmatprep.subr.bf16.mxu0 0
          %1469 = vmatpush1.bf16.msra.mxu0 0
          %1470 = vmatprep.mubr.bf16.mxu0 0
          %1471 = vmatmul.mubr.bf16.gmra.mrb[0].mxu0 %v1359
          %v1472 = vpop.f32.mrb[0].mxu0
          %v1473 = vadd.f32 %v1388, %v1472
          %v1474 = vpop.f32.mrb[0].mxu0
          %v1475 = vpop.f32.mrb[0].mxu0
          %v1476 = vadd.f32 %v1388, %v1475
          %v1477 = vpop.f32.mrb[0].mxu0
          %1478 = vmatprep.mubr.bf16.mxu0 0
          %1479 = vmatmul.mubr.bf16.gmra.mrb[0].mxu0 %v1360
          %v1480 = vpop.f32.mrb[0].mxu0
          %v1481 = vadd.f32 %v1388, %v1480
          %v1482 = vpop.f32.mrb[0].mxu0
          %v1483 = vpop.f32.mrb[0].mxu0
          %v1484 = vadd.f32 %v1388, %v1483
          %v1485 = vpop.f32.mrb[0].mxu0
          %1486 = vmatprep.mubr.bf16.mxu0 0
          %1487 = vmatmul.mubr.bf16.gmra.mrb[0].mxu0 %v1361
          %v1488 = vpop.f32.mrb[0].mxu0
          %v1489 = vadd.f32 %v1388, %v1488
          %v1490 = vpop.f32.mrb[0].mxu0
          %v1491 = vpop.f32.mrb[0].mxu0
          %v1492 = vadd.f32 %v1388, %v1491
          %v1493 = vpop.f32.mrb[0].mxu0
          %1494 = vmatprep.mubr.bf16.mxu0 0
          %1495 = vmatmul.mubr.bf16.gmra.mrb[0].mxu0 %v1362
          %v1496 = vpop.f32.mrb[0].mxu0
          %v1497 = vadd.f32 %v1388, %v1496
          %v1498 = vpop.f32.mrb[0].mxu0
          %v1499 = vpop.f32.mrb[0].mxu0
          %v1500 = vadd.f32 %v1388, %v1499
          %v1501 = vpop.f32.mrb[0].mxu0
          %1502 = vmatprep.mubr.bf16.mxu0 0
          %1503 = vmatmul.mubr.bf16.gmra.mrb[0].mxu0 %v1363
          %v1504 = vpop.f32.mrb[0].mxu0
          %v1505 = vadd.f32 %v1388, %v1504
          %v1506 = vpop.f32.mrb[0].mxu0
          %v1507 = vpop.f32.mrb[0].mxu0
          %v1508 = vadd.f32 %v1388, %v1507
          %v1509 = vpop.f32.mrb[0].mxu0
          %1510 = vmatprep.mubr.bf16.mxu0 0
          %1511 = vmatmul.mubr.bf16.gmra.mrb[0].mxu0 %v1364
          %v1512 = vpop.f32.mrb[0].mxu0
          %v1513 = vadd.f32 %v1388, %v1512
          %v1514 = vpop.f32.mrb[0].mxu0
          %v1515 = vpop.f32.mrb[0].mxu0
          %v1516 = vadd.f32 %v1388, %v1515
          %v1517 = vpop.f32.mrb[0].mxu0
          %1518 = vmatprep.mubr.bf16.mxu0 0
          %1519 = vmatmul.mubr.bf16.gmra.mrb[0].mxu0 %v1365
          %v1520 = vpop.f32.mrb[0].mxu0
          %v1521 = vadd.f32 %v1388, %v1520
          %v1522 = vpop.f32.mrb[0].mxu0
          %v1523 = vpop.f32.mrb[0].mxu0
          %v1524 = vadd.f32 %v1388, %v1523
          %v1525 = vpop.f32.mrb[0].mxu0
          %1526 = vmatprep.mubr.bf16.mxu0 0
          %1527 = vmatmul.mubr.bf16.gmra.mrb[0].mxu0 %v1366
          %v1528 = vpop.f32.mrb[0].mxu0
          %v1529 = vadd.f32 %v1388, %v1528
          %v1530 = vpop.f32.mrb[0].mxu0
          %v1531 = vpop.f32.mrb[0].mxu0
          %v1532 = vadd.f32 %v1388, %v1531
          %v1533 = vpop.f32.mrb[0].mxu0
          %1534 = vdwg.mxu0
          %v1535 = vmax.f32 %v1473, 0.0
          %v1536 = vmax.f32 %v1476, 0.0
          %v1537 = vmax.f32 %v1481, 0.0
          %v1538 = vmax.f32 %v1484, 0.0
          %v1539 = vmax.f32 %v1489, 0.0
          %v1540 = vmax.f32 %v1492, 0.0
          %v1541 = vmax.f32 %v1497, 0.0
          %v1542 = vmax.f32 %v1500, 0.0
          %v1543 = vmax.f32 %v1505, 0.0
          %v1544 = vmax.f32 %v1508, 0.0
          %v1545 = vmax.f32 %v1513, 0.0
          %v1546 = vmax.f32 %v1516, 0.0
          %v1547 = vmax.f32 %v1521, 0.0
          %v1548 = vmax.f32 %v1524, 0.0
          %v1549 = vmax.f32 %v1529, 0.0
          %v1550 = vmax.f32 %v1532, 0.0
          %v1551 = vpack.c.bf16 %v1536, %v1535
          %v1552 = vpack.c.bf16 %v1538, %v1537
          %v1553 = vpack.c.bf16 %v1540, %v1539
          %v1554 = vpack.c.bf16 %v1542, %v1541
          %v1555 = vpack.c.bf16 %v1544, %v1543
          %v1556 = vpack.c.bf16 %v1546, %v1545
          %v1557 = vpack.c.bf16 %v1548, %v1547
          %v1558 = vpack.c.bf16 %v1550, %v1549
          %s1559 = sshra.s32 %s637, 4
          %s1560 = sand.u32 %s637, 15
          %s1561 = smul.u32 %s636, 8
          %s1562 = sadd.s32 %s1559, %s1561
          %s1563 = smul.addr %s1562, 8
          %s1564 = scalar_lea.vmem [#allocation2], %s1563
          %1565 = vst [vmem:[%s1564] sm:$0xff] %v1551
          %1566 = vst [vmem:[%s1564 + $0x8] sm:$0xff] %v1552
          %1567 = vst [vmem:[%s1564 + $0x10] sm:$0xff] %v1553
          %1568 = vst [vmem:[%s1564 + $0x18] sm:$0xff] %v1554
          %1569 = vst [vmem:[%s1564 + $0x20] sm:$0xff] %v1555
          %1570 = vst [vmem:[%s1564 + $0x28] sm:$0xff] %v1556
          %1571 = vst [vmem:[%s1564 + $0x30] sm:$0xff] %v1557
          %1572 = vst [vmem:[%s1564 + $0x38] sm:$0xff] %v1558
          %s1573 = smul.u32 %s624, 16
          %s1574 = scalar_lea.vmem [#allocation4], %s1573
          %v1575 = vld [vmem:[%s1574] sm:$0xff]
          %v1576 = vld [vmem:[%s1574 + $0x8] sm:$0xff]
          %v1577 = vld [vmem:[#allocation8] sm:$0xf]
          %v1578 = vld [vmem:[#allocation8 + $0x4] sm:$0xf]
          %v1581 = vunpack.c.l.b16 %v1577
          %v1582 = vunpack.c.l.b16 %v1578
          %v1583 = vpack.c.b16 %v1582, %v1581
          %1585 = vmatprep.subr.bf16.mxu0 0
          %1586 = vmatpush1.bf16.msra.mxu0 %v1551
          %1587 = vmatprep.subr.bf16.mxu0 0
          %1588 = vmatpush1.bf16.msra.mxu0 %v1552
          %1589 = vmatprep.subr.bf16.mxu0 0
          %1590 = vmatpush1.bf16.msra.mxu0 %v1553
          %1591 = vmatprep.subr.bf16.mxu0 0
          %1592 = vmatpush1.bf16.msra.mxu0 %v1554
          %1593 = vmatprep.subr.bf16.mxu0 0
          %1594 = vmatpush1.bf16.msra.mxu0 %v1555
          %1595 = vmatprep.subr.bf16.mxu0 0
          %1596 = vmatpush1.bf16.msra.mxu0 %v1556
          %1597 = vmatprep.subr.bf16.mxu0 0
          %1598 = vmatpush1.bf16.msra.mxu0 %v1557
          %1599 = vmatprep.subr.bf16.mxu0 0
          %1600 = vmatpush1.bf16.msra.mxu0 %v1558
          %1601 = vmatprep.subr.bf16.mxu0 0
          %1602 = vmatpush1.bf16.msra.mxu0 0
          %1603 = vmatprep.subr.bf16.mxu0 0
          %1604 = vmatpush1.bf16.msra.mxu0 0
          %1605 = vmatprep.subr.bf16.mxu0 0
          %1606 = vmatpush1.bf16.msra.mxu0 0
          %1607 = vmatprep.subr.bf16.mxu0 0
          %1608 = vmatpush1.bf16.msra.mxu0 0
          %1609 = vmatprep.subr.bf16.mxu0 0
          %1610 = vmatpush1.bf16.msra.mxu0 0
          %1611 = vmatprep.subr.bf16.mxu0 0
          %1612 = vmatpush1.bf16.msra.mxu0 0
          %1613 = vmatprep.subr.bf16.mxu0 0
          %1614 = vmatpush1.bf16.msra.mxu0 0
          %1615 = vmatprep.subr.bf16.mxu0 0
          %1616 = vmatpush1.bf16.msra.mxu0 0
          %1617 = vmatprep.mubr.bf16.mxu0 0
          %1618 = vmatmul.mubr.bf16.gmra.mrb[0].mxu0 %v1583
          %v1619 = vpop.f32.mrb[0].mxu0
          %v1620 = vadd.f32 0.0, %v1619
          %v1621 = vpop.f32.mrb[0].mxu0
          %v1622 = vpop.f32.mrb[0].mxu0
          %v1623 = vadd.f32 0.0, %v1622
          %v1624 = vpop.f32.mrb[0].mxu0
          %1625 = vdwg.mxu0
          %v1626 = vadd.f32 %v1575, %v1620
          %v1627 = vadd.f32 %v1576, %v1623
          %1628 = vst [vmem:[%s1574] sm:$0xff] %v1626
          %1629 = vst [vmem:[%s1574 + $0x8] sm:$0xff] %v1627
        $region116: #{forward.1} parent=59 // pred_fallthru
          _
        %p1630 = scmp.eq.s32.totalorder %s39, 1
        %p1631 = pnand %p1630, %p640
        %p1632 = pneg %p1631
        %p1633 = pnand %p1632, %p643
        %p1634 = pneg %p1633
        // Predicated region
        $region117: #{forward.1} parent=59 // pred_check
          _
        $region118: #{forward.1} parent=59 // pred_check_branch
          %1636 = sbr.rel (%p1633) target = $region120
        $region119: #{forward.1} parent=59 // pred_region
          %v1637 = vld [vmem:[#allocation4] sm:$0xff]
          %v1638 = vld [vmem:[#allocation4 + $0x8] sm:$0xff]
          %s1639 = scalar_lea.vmem [#allocation4], 16
          %v1640 = vld [vmem:[%s1639] sm:$0xff]
          %v1641 = vld [vmem:[%s1639 + $0x8] sm:$0xff]
          %s1642 = scalar_lea.vmem [#allocation4], 32
          %v1643 = vld [vmem:[%s1642] sm:$0xff]
          %v1644 = vld [vmem:[%s1642 + $0x8] sm:$0xff]
          %v1645 = vpack.c.bf16 %v1638, %v1637
          %v1646 = vpack.c.bf16 %v1641, %v1640
          %v1647 = vpack.c.bf16 %v1644, %v1643
          %v1648 = vld [vmem:[#allocation19] sm:$0xf]
          %v1649 = vld [vmem:[#allocation19 + $0x4] sm:$0xf]
          %v1650 = vld [vmem:[#allocation19 + $0x8] sm:$0xf]
          %v1651 = vld [vmem:[#allocation19 + $0xc] sm:$0xf]
          %v1652 = vld [vmem:[#allocation19 + $0x10] sm:$0xf]
          %v1653 = vld [vmem:[#allocation19 + $0x14] sm:$0xf]
          %v1654 = vld [vmem:[#allocation19 + $0x18] sm:$0xf]
          %v1655 = vld [vmem:[#allocation19 + $0x1c] sm:$0xf]
          %v1656 = vld [vmem:[#allocation19 + $0x20] sm:$0xf]
          %v1657 = vld [vmem:[#allocation19 + $0x24] sm:$0xf]
          %v1658 = vld [vmem:[#allocation19 + $0x28] sm:$0xf]
          %v1659 = vld [vmem:[#allocation19 + $0x2c] sm:$0xf]
          %v1660 = vld [vmem:[#allocation19 + $0x30] sm:$0xf]
          %v1661 = vld [vmem:[#allocation19 + $0x34] sm:$0xf]
          %v1662 = vld [vmem:[#allocation19 + $0x38] sm:$0xf]
          %v1663 = vld [vmem:[#allocation19 + $0x3c] sm:$0xf]
          %v1664 = vld [vmem:[#allocation19 + $0x40] sm:$0xf]
          %v1665 = vld [vmem:[#allocation19 + $0x44] sm:$0xf]
          %v1666 = vld [vmem:[#allocation19 + $0x48] sm:$0xf]
          %v1667 = vld [vmem:[#allocation19 + $0x4c] sm:$0xf]
          %v1668 = vld [vmem:[#allocation19 + $0x50] sm:$0xf]
          %v1669 = vld [vmem:[#allocation19 + $0x54] sm:$0xf]
          %v1670 = vld [vmem:[#allocation19 + $0x58] sm:$0xf]
          %v1671 = vld [vmem:[#allocation19 + $0x5c] sm:$0xf]
          %v1672 = vld [vmem:[#allocation19 + $0x60] sm:$0xf]
          %v1673 = vld [vmem:[#allocation19 + $0x64] sm:$0xf]
          %v1674 = vld [vmem:[#allocation19 + $0x68] sm:$0xf]
          %v1675 = vld [vmem:[#allocation19 + $0x6c] sm:$0xf]
          %v1676 = vld [vmem:[#allocation19 + $0x70] sm:$0xf]
          %v1677 = vld [vmem:[#allocation19 + $0x74] sm:$0xf]
          %v1678 = vld [vmem:[#allocation19 + $0x78] sm:$0xf]
          %v1679 = vld [vmem:[#allocation19 + $0x7c] sm:$0xf]
          %v1680 = vld [vmem:[#allocation19 + $0x80] sm:$0xf]
          %v1681 = vld [vmem:[#allocation19 + $0x84] sm:$0xf]
          %v1682 = vld [vmem:[#allocation19 + $0x88] sm:$0xf]
          %v1683 = vld [vmem:[#allocation19 + $0x8c] sm:$0xf]
          %v1684 = vld [vmem:[#allocation19 + $0x90] sm:$0xf]
          %v1685 = vld [vmem:[#allocation19 + $0x94] sm:$0xf]
          %v1686 = vld [vmem:[#allocation19 + $0x98] sm:$0xf]
          %v1687 = vld [vmem:[#allocation19 + $0x9c] sm:$0xf]
          %v1688 = vld [vmem:[#allocation19 + $0xa0] sm:$0xf]
          %v1689 = vld [vmem:[#allocation19 + $0xa4] sm:$0xf]
          %v1690 = vld [vmem:[#allocation19 + $0xa8] sm:$0xf]
          %v1691 = vld [vmem:[#allocation19 + $0xac] sm:$0xf]
          %v1692 = vld [vmem:[#allocation19 + $0xb0] sm:$0xf]
          %v1693 = vld [vmem:[#allocation19 + $0xb4] sm:$0xf]
          %v1694 = vld [vmem:[#allocation19 + $0xb8] sm:$0xf]
          %v1695 = vld [vmem:[#allocation19 + $0xbc] sm:$0xf]
          %v1696 = vld [vmem:[#allocation20] sm:$0x1]
          %v1698 = vlaneseq
          %v1699 = vshrl.u32 %v1698, 7
          %v1700 = vsub.s32 0, %v1699
          %v1701 = vrot.slane %v1696, %v1700
          %v1751 = vunpack.c.l.b16 %v1648
          %v1752 = vunpack.c.l.b16 %v1649
          %v1753 = vunpack.c.l.b16 %v1650
          %v1754 = vunpack.c.l.b16 %v1651
          %v1755 = vunpack.c.l.b16 %v1652
          %v1756 = vunpack.c.l.b16 %v1653
          %v1757 = vunpack.c.l.b16 %v1654
          %v1758 = vunpack.c.l.b16 %v1655
          %v1759 = vunpack.c.l.b16 %v1656
          %v1760 = vunpack.c.l.b16 %v1657
          %v1761 = vunpack.c.l.b16 %v1658
          %v1762 = vunpack.c.l.b16 %v1659
          %v1763 = vunpack.c.l.b16 %v1660
          %v1764 = vunpack.c.l.b16 %v1661
          %v1765 = vunpack.c.l.b16 %v1662
          %v1766 = vunpack.c.l.b16 %v1663
          %v1767 = vunpack.c.l.b16 %v1664
          %v1768 = vunpack.c.l.b16 %v1665
          %v1769 = vunpack.c.l.b16 %v1666
          %v1770 = vunpack.c.l.b16 %v1667
          %v1771 = vunpack.c.l.b16 %v1668
          %v1772 = vunpack.c.l.b16 %v1669
          %v1773 = vunpack.c.l.b16 %v1670
          %v1774 = vunpack.c.l.b16 %v1671
          %v1775 = vunpack.c.l.b16 %v1672
          %v1776 = vunpack.c.l.b16 %v1673
          %v1777 = vunpack.c.l.b16 %v1674
          %v1778 = vunpack.c.l.b16 %v1675
          %v1779 = vunpack.c.l.b16 %v1676
          %v1780 = vunpack.c.l.b16 %v1677
          %v1781 = vunpack.c.l.b16 %v1678
          %v1782 = vunpack.c.l.b16 %v1679
          %v1783 = vunpack.c.l.b16 %v1680
          %v1784 = vunpack.c.l.b16 %v1681
          %v1785 = vunpack.c.l.b16 %v1682
          %v1786 = vunpack.c.l.b16 %v1683
          %v1787 = vunpack.c.l.b16 %v1684
          %v1788 = vunpack.c.l.b16 %v1685
          %v1789 = vunpack.c.l.b16 %v1686
          %v1790 = vunpack.c.l.b16 %v1687
          %v1791 = vunpack.c.l.b16 %v1688
          %v1792 = vunpack.c.l.b16 %v1689
          %v1793 = vunpack.c.l.b16 %v1690
          %v1794 = vunpack.c.l.b16 %v1691
          %v1795 = vunpack.c.l.b16 %v1692
          %v1796 = vunpack.c.l.b16 %v1693
          %v1797 = vunpack.c.l.b16 %v1694
          %v1798 = vunpack.c.l.b16 %v1695
          %v1799 = vpack.c.b16 %v1752, %v1751
          %v1800 = vpack.c.b16 %v1754, %v1753
          %v1801 = vpack.c.b16 %v1756, %v1755
          %v1802 = vpack.c.b16 %v1758, %v1757
          %v1803 = vpack.c.b16 %v1760, %v1759
          %v1804 = vpack.c.b16 %v1762, %v1761
          %v1805 = vpack.c.b16 %v1764, %v1763
          %v1806 = vpack.c.b16 %v1766, %v1765
          %v1807 = vpack.c.b16 %v1768, %v1767
          %v1808 = vpack.c.b16 %v1770, %v1769
          %v1809 = vpack.c.b16 %v1772, %v1771
          %v1810 = vpack.c.b16 %v1774, %v1773
          %v1811 = vpack.c.b16 %v1776, %v1775
          %v1812 = vpack.c.b16 %v1778, %v1777
          %v1813 = vpack.c.b16 %v1780, %v1779
          %v1814 = vpack.c.b16 %v1782, %v1781
          %v1815 = vpack.c.b16 %v1784, %v1783
          %v1816 = vpack.c.b16 %v1786, %v1785
          %v1817 = vpack.c.b16 %v1788, %v1787
          %v1818 = vpack.c.b16 %v1790, %v1789
          %v1819 = vpack.c.b16 %v1792, %v1791
          %v1820 = vpack.c.b16 %v1794, %v1793
          %v1821 = vpack.c.b16 %v1796, %v1795
          %v1822 = vpack.c.b16 %v1798, %v1797
          %1847 = vmatprep.subr.bf16.mxu0 0
          %1848 = vmatpush1.bf16.msra.mxu0 %v1799
          %1849 = vmatprep.subr.bf16.mxu0 0
          %1850 = vmatpush1.bf16.msra.mxu0 %v1800
          %1851 = vmatprep.subr.bf16.mxu0 0
          %1852 = vmatpush1.bf16.msra.mxu0 %v1801
          %1853 = vmatprep.subr.bf16.mxu0 0
          %1854 = vmatpush1.bf16.msra.mxu0 %v1802
          %1855 = vmatprep.subr.bf16.mxu0 0
          %1856 = vmatpush1.bf16.msra.mxu0 %v1803
          %1857 = vmatprep.subr.bf16.mxu0 0
          %1858 = vmatpush1.bf16.msra.mxu0 %v1804
          %1859 = vmatprep.subr.bf16.mxu0 0
          %1860 = vmatpush1.bf16.msra.mxu0 %v1805
          %1861 = vmatprep.subr.bf16.mxu0 0
          %1862 = vmatpush1.bf16.msra.mxu0 %v1806
          %1863 = vmatprep.subr.bf16.mxu0 0
          %1864 = vmatpush1.bf16.msra.mxu0 %v1807
          %1865 = vmatprep.subr.bf16.mxu0 0
          %1866 = vmatpush1.bf16.msra.mxu0 %v1808
          %1867 = vmatprep.subr.bf16.mxu0 0
          %1868 = vmatpush1.bf16.msra.mxu0 %v1809
          %1869 = vmatprep.subr.bf16.mxu0 0
          %1870 = vmatpush1.bf16.msra.mxu0 %v1810
          %1871 = vmatprep.subr.bf16.mxu0 0
          %1872 = vmatpush1.bf16.msra.mxu0 %v1811
          %1873 = vmatprep.subr.bf16.mxu0 0
          %1874 = vmatpush1.bf16.msra.mxu0 %v1812
          %1875 = vmatprep.subr.bf16.mxu0 0
          %1876 = vmatpush1.bf16.msra.mxu0 %v1813
          %1877 = vmatprep.subr.bf16.mxu0 0
          %1878 = vmatpush1.bf16.msra.mxu0 %v1814
          %1879 = vmatprep.mubr.bf16.mxu0 %v1646
          %1880 = vmatmul.mubr.bf16.gmra.mrb[0].mxu0 %v1645
          %v1881 = vpop.f32.mrb[0].mxu0
          %v1882 = vadd.f32 %v1701, %v1881
          %v1883 = vpop.f32.mrb[0].mxu0
          %v1884 = vpop.f32.mrb[0].mxu0
          %v1885 = vadd.f32 %v1701, %v1884
          %v1886 = vpop.f32.mrb[0].mxu0
          %1887 = vdwg.mxu0
          %1888 = vmatprep.subr.bf16.mxu0 0
          %1889 = vmatpush1.bf16.msra.mxu0 %v1815
          %1890 = vmatprep.subr.bf16.mxu0 0
          %1891 = vmatpush1.bf16.msra.mxu0 %v1816
          %1892 = vmatprep.subr.bf16.mxu0 0
          %1893 = vmatpush1.bf16.msra.mxu0 %v1817
          %1894 = vmatprep.subr.bf16.mxu0 0
          %1895 = vmatpush1.bf16.msra.mxu0 %v1818
          %1896 = vmatprep.subr.bf16.mxu0 0
          %1897 = vmatpush1.bf16.msra.mxu0 %v1819
          %1898 = vmatprep.subr.bf16.mxu0 0
          %1899 = vmatpush1.bf16.msra.mxu0 %v1820
          %1900 = vmatprep.subr.bf16.mxu0 0
          %1901 = vmatpush1.bf16.msra.mxu0 %v1821
          %1902 = vmatprep.subr.bf16.mxu0 0
          %1903 = vmatpush1.bf16.msra.mxu0 %v1822
          %1904 = vmatprep.subr.bf16.mxu0 0
          %1905 = vmatpush1.bf16.msra.mxu0 0
          %1906 = vmatprep.subr.bf16.mxu0 0
          %1907 = vmatpush1.bf16.msra.mxu0 0
          %1908 = vmatprep.subr.bf16.mxu0 0
          %1909 = vmatpush1.bf16.msra.mxu0 0
          %1910 = vmatprep.subr.bf16.mxu0 0
          %1911 = vmatpush1.bf16.msra.mxu0 0
          %1912 = vmatprep.subr.bf16.mxu0 0
          %1913 = vmatpush1.bf16.msra.mxu0 0
          %1914 = vmatprep.subr.bf16.mxu0 0
          %1915 = vmatpush1.bf16.msra.mxu0 0
          %1916 = vmatprep.subr.bf16.mxu0 0
          %1917 = vmatpush1.bf16.msra.mxu0 0
          %1918 = vmatprep.subr.bf16.mxu0 0
          %1919 = vmatpush1.bf16.msra.mxu0 0
          %1920 = vmatprep.mubr.bf16.mxu0 0
          %1921 = vmatmul.mubr.bf16.gmra.mrb[0].mxu0 %v1647
          %v1922 = vpop.f32.mrb[0].mxu0
          %v1923 = vadd.f32 %v1882, %v1922
          %v1924 = vpop.f32.mrb[0].mxu0
          %v1925 = vpop.f32.mrb[0].mxu0
          %v1926 = vadd.f32 %v1885, %v1925
          %v1927 = vpop.f32.mrb[0].mxu0
          %1928 = vdwg.mxu0
          %1929 = vst [vmem:[#allocation22] sm:$0xff] %v1923
          %1930 = vst [vmem:[#allocation22 + $0x8] sm:$0xff] %v1926
        $region120: #{forward.1} parent=59 // pred_fallthru
          _
        // Predicated region
        $region121: #{forward.1} parent=59 // pred_check
          %p1931 = pneg %p313
        $region122: #{forward.1} parent=59 // pred_check_branch
          %1933 = sbr.rel (%p1931) target = $region124
        $region123: #{forward.1} parent=59 // pred_region
          %s1935 = ssub.s32 256, 256
          %1936 = vsyncadd [#allocation7], %s1935
          %s1937 = sshll.u32 [#allocation22], 4
          %s1938 = int_to_ptr.vmem [resolvable:$true] %s1937
          %1943 = dma.vmem_to_hbm [thread:$0]  %s1938, 256, %s10, [#allocation7], 128, 128, 8
        $region124: #{forward.1} parent=59 // pred_fallthru
          _
        // Predicated region
        $region125: #{forward.1} parent=59 // pred_check
          %p1944 = pneg %p313
        $region126: #{forward.1} parent=59 // pred_check_branch
          %1946 = sbr.rel (%p1944) target = $region128
        $region127: #{forward.1} parent=59 // pred_region
          %1947 = dma.done [#allocation7], 256
        $region128: #{forward.1} parent=59 // pred_fallthru
          _
      $region60: #{forward.1} parent=5 // pred_fallthru
        _
      %p1948 = scmp.le.s32.totalorder 2, %s29
      // Predicated region
      $region129: #{forward.1} parent=5 // pred_check
        %p1949 = pneg %p1948
      $region130: #{forward.1} parent=5 // pred_check_branch
        %1951 = sbr.rel (%p1949) target = $region132
      $region131: #{forward.1} parent=5 // pred_region
        %s1952 = ssub.s32 %s29, 2
      $region132: #{forward.1} parent=5 // pred_fallthru
        _
    $region6: #{forward.1} parent=1 // loop_footer
      %s33 = sadd.s32 1, %s29
    $region7: #{forward.1} parent=1 // loop_footer_branch
      %28 = sbr.rel target = $region3
    $region8: #{forward.1} parent=1 // loop_exit
      _
    %1953 = vsyncpa [#allocation6], 1
    %s1954 = scalar_lea.sflag [#allocation6], 1
    %1955 = vsyncpa %s1954, 1
    %1956 = vsyncpa [#allocation9], 1
    %1957 = vsyncpa [#allocation12], 1
    %s1958 = scalar_lea.sflag [#allocation12], 1
    %1959 = vsyncpa %s1958, 1
    %1960 = vsyncpa [#allocation15], 1
    %s1961 = scalar_lea.sflag [#allocation15], 1
    %1962 = vsyncpa %s1961, 1
    %1963 = vsyncpa [#allocation18], 1
    %s1964 = scalar_lea.sflag [#allocation18], 1
    %1965 = vsyncpa %s1964, 1
    %1966 = vsyncpa [#allocation21], 1
    %1967 = vsyncpa [#allocation7], 1
    %s1968 = scalar_lea.sflag [#allocation7], 1
    %1969 = vsyncpa %s1968, 1

</llo_original>
